<compile_context>
chip_gen: v7x
topology: tpu7x:2x2x1
jax: 0.10.0
libtpu: 0.0.40
codegen_flags: <defaults>
</compile_context>

<pallas_src>
import jax
import jax.numpy as jnp
from jax.experimental import pallas as pl
from jax.experimental.pallas import tpu as pltpu


# ---------------------------------------------------------------------------
# Fused kernel: embedding gather + GRU step (L layers) + fc projection
# ---------------------------------------------------------------------------

def fused_decoder_kernel(tok_ref,            # SMEM (B_pad,) int32 token ids
                         emb_hbm,            # HBM  (V, D) f32 embedding table
                         w_ih_ref,           # VMEM (L, D, 3H) compute dtype
                         w_hh_ref,           # VMEM (L, H, 3H) compute dtype
                         b_i_ref,            # VMEM (L, 1, 3H) f32
                         b_h_ref,            # VMEM (L, 1, 3H) f32
                         fc_w_ref,           # VMEM (H, V_pad) compute dtype
                         fc_b_ref,           # VMEM (1, V_pad) f32
                         h0_ref,             # VMEM (L, B_pad, H) f32
                         h_out_ref,          # VMEM (L, B_pad, H) f32 (aliased with h0)
                         logits_ref,         # VMEM (B_pad, V_pad) f32
                         x_buf,              # VMEM scratch (B_pad, D) f32
                         emb_sem):           # DMA semaphores (B_pad,)
    L = h0_ref.shape[0]
    H = h0_ref.shape[2]
    B_pad = x_buf.shape[0]
    cdt = w_ih_ref.dtype                     # matmul operand dtype (bf16 or f32)

    # --- Embedding: gather B_pad rows of the HBM table with per-row DMAs.
    # The table stays in HBM; only B_pad * D * 4 bytes move.  f32 rows keep
    # each transfer exactly one sublane row (no bf16 sublane-packing issues).
    copies = []
    for i in range(B_pad):                   # static unroll; B_pad is small
        cp = pltpu.make_async_copy(
            emb_hbm.at[pl.ds(tok_ref[i], 1), :],   # (1, D) dynamic row window
            x_buf.at[pl.ds(i, 1), :],
            emb_sem.at[i])
        cp.start()
        copies.append(cp)
    for cp in copies:
        cp.wait()

    # --- GRU: one time step over L stacked layers (PyTorch gate order r,z,n).
    x = x_buf[...]                           # (B_pad, D) f32
    for l in range(L):                       # static unroll; L is small
        h_prev = h0_ref[l]                   # (B_pad, H) f32
        # Fused gate matmuls: two (B,3H) MXU dots with f32 accumulation
        # instead of six (B,H) dots.  b_i already contains b_ih + b_hh for
        # the r/z gates; b_h is zero except for the n-gate hidden bias.
        gi = jnp.dot(x.astype(cdt), w_ih_ref[l],
                     preferred_element_type=jnp.float32) + b_i_ref[l]
        gh = jnp.dot(h_prev.astype(cdt), w_hh_ref[l],
                     preferred_element_type=jnp.float32) + b_h_ref[l]
        r = jax.nn.sigmoid(gi[:, 0:H] + gh[:, 0:H])
        z = jax.nn.sigmoid(gi[:, H:2 * H] + gh[:, H:2 * H])
        n = jnp.tanh(gi[:, 2 * H:3 * H] + r * gh[:, 2 * H:3 * H])
        h_new = (1.0 - z) * n + z * h_prev   # gate math / blend kept in f32
        h_out_ref[l] = h_new                 # h0 is aliased: in-place update
        x = h_new                            # input to the next layer

    # --- fc: logits = h_top @ fc_w + fc_b (single cast of h_top, lane-dense
    # stores because V_pad is a multiple of 128).
    logits_ref[...] = (jnp.dot(x.astype(cdt), fc_w_ref[...],
                               preferred_element_type=jnp.float32)
                       + fc_b_ref[...])


# ---------------------------------------------------------------------------
# One-time parameter preparation (run at init, NOT per forward call)
# ---------------------------------------------------------------------------

def prepare_params(params, compute_dtype=jnp.bfloat16):
    L = len(params["w_ih"])
    H = params["w_hh"][0].shape[1]
    D = params["w_ih"][0].shape[1]
    V = params["fc_w"].shape[0]
    assert D == H, "stacked GRU weights require EMBEDDING_DIM == HIDDEN_SIZE"

    # Gates stay concatenated along the output (lane) axis: (L, in, 3H).
    w_ih = jnp.stack([params["w_ih"][l].T for l in range(L)]).astype(compute_dtype)
    w_hh = jnp.stack([params["w_hh"][l].T for l in range(L)]).astype(compute_dtype)

    zeros_h = jnp.zeros((H,), jnp.float32)
    # Fold b_hh's r/z parts into the input bias; keep b_hn separate (r * gh_n).
    b_i = jnp.stack(
        [(params["b_ih"][l]
          + jnp.concatenate([params["b_hh"][l][:2 * H], zeros_h]))[None, :]
         for l in range(L)]).astype(jnp.float32)                      # (L, 1, 3H)
    b_h = jnp.stack(
        [jnp.concatenate([zeros_h, zeros_h, params["b_hh"][l][2 * H:]])[None, :]
         for l in range(L)]).astype(jnp.float32)                      # (L, 1, 3H)

    # Pad the vocab axis to a lane multiple of 128 once, here.
    V_pad = -(-V // 128) * 128
    fc_w = jnp.pad(params["fc_w"].T, ((0, 0), (0, V_pad - V))).astype(compute_dtype)
    fc_b = jnp.pad(params["fc_b"], (0, V_pad - V))[None, :].astype(jnp.float32)

    return {
        "emb": params["emb"].astype(jnp.float32),     # (V, D) stays in HBM, f32 rows
        "w_ih": w_ih, "w_hh": w_hh, "b_i": b_i, "b_h": b_h,
        "fc_w": fc_w,                                  # (H, V_pad)
        "fc_b": fc_b,                                  # (1, V_pad)
    }


# ---------------------------------------------------------------------------
# Forward wrapper (hot-loop API: everything stays padded across decode steps)
# ---------------------------------------------------------------------------

@jax.jit
def simple_decoder_forward(tokens_p, h_p, prep):
    """One fused decode step.

    tokens_p: (B_pad,) int32 (pad slots may hold any valid token id)
    h_p:      (L, B_pad, H) f32 persistently padded hidden state
    returns:  (logits (B_pad, V_pad) f32, hidden (L, B_pad, H) f32)
    """
    L, B_pad, H = h_p.shape
    D = prep["emb"].shape[1]
    V_pad = prep["fc_b"].shape[1]

    vmem = pl.BlockSpec(memory_space=pltpu.MemorySpace.VMEM)
    smem = pl.BlockSpec(memory_space=pltpu.MemorySpace.SMEM)
    hbm = pl.BlockSpec(memory_space=pl.ANY)

    # Total VMEM here is < 1 MiB (weights ~0.4 MiB bf16 + fc_w 64 KiB), well
    # under v7x's 64 MiB / 32 MiB scoped default -- no vmem_limit_bytes needed.
    hidden, logits = pl.pallas_call(
        fused_decoder_kernel,
        out_shape=(jax.ShapeDtypeStruct((L, B_pad, H), jnp.float32),
                   jax.ShapeDtypeStruct((B_pad, V_pad), jnp.float32)),
        in_specs=[smem, hbm, vmem, vmem, vmem, vmem, vmem, vmem, vmem],
        out_specs=(vmem, vmem),
        scratch_shapes=[pltpu.VMEM((B_pad, D), jnp.float32),
                        pltpu.SemaphoreType.DMA((B_pad,))],
        input_output_aliases={8: 0},   # h_p buffer reused for the hidden out
    )(tokens_p, prep["emb"], prep["w_ih"], prep["w_hh"],
      prep["b_i"], prep["b_h"], prep["fc_w"], prep["fc_b"], h_p)

    return logits, hidden


# ---------------------------------------------------------------------------
# Pure-JAX reference (mirrors PyTorch SimpleDecoder.forward with seq_len == 1)
# ---------------------------------------------------------------------------

def reference_forward(tokens, h0, params):
    L, _, H = h0.shape
    x = params["emb"][tokens[:, 0]]                      # (B, D)
    h_out = []
    for l in range(L):
        h_prev = h0[l]
        gi = x @ params["w_ih"][l].T + params["b_ih"][l]
        gh = h_prev @ params["w_hh"][l].T + params["b_hh"][l]
        i_r, i_z, i_n = gi[:, :H], gi[:, H:2 * H], gi[:, 2 * H:]
        h_r, h_z, h_n = gh[:, :H], gh[:, H:2 * H], gh[:, 2 * H:]
        r = jax.nn.sigmoid(i_r + h_r)
        z = jax.nn.sigmoid(i_z + h_z)
        n = jnp.tanh(i_n + r * h_n)
        h_new = (1.0 - z) * n + z * h_prev
        h_out.append(h_new)
        x = h_new
    out = x @ params["fc_w"].T + params["fc_b"]
    return out, jnp.stack(h_out)


if __name__ == "__main__":
    # configure = dict(INPUT_SIZE=256, EMBEDDING_DIM=128, HIDDEN_SIZE=128, NUM_LAYERS=2)
    V, D, H, L = 256, 128, 128, 2
    B, T = 2, 1   # T must be 1 (fc expects HIDDEN_SIZE features after .view(B, -1))

    key = jax.random.PRNGKey(0)
    keys = jax.random.split(key, 8 + 4 * L)
    ki = iter(keys)

    params = {
        "emb": jax.random.normal(next(ki), (V, D), jnp.float32) * 0.1,
        "w_ih": [jax.random.normal(next(ki), (3 * H, D if l == 0 else H), jnp.float32) * 0.1
                 for l in range(L)],
        "w_hh": [jax.random.normal(next(ki), (3 * H, H), jnp.float32) * 0.1 for l in range(L)],
        "b_ih": [jax.random.normal(next(ki), (3 * H,), jnp.float32) * 0.1 for l in range(L)],
        "b_hh": [jax.random.normal(next(ki), (3 * H,), jnp.float32) * 0.1 for l in range(L)],
        "fc_w": jax.random.normal(next(ki), (V, H), jnp.float32) * 0.1,
        "fc_b": jax.random.normal(next(ki), (V,), jnp.float32) * 0.1,
    }

    tokens = jax.random.randint(next(ki), (B, T), 0, V, dtype=jnp.int32)
    h0 = jax.random.normal(next(ki), (L, B, H), jnp.float32)

    ref_out, ref_hidden = reference_forward(tokens, h0, params)

    # One-time padding of the decode state; in a real decode loop these stay
    # padded (and the logits stay (B_pad, V_pad)) across steps.
    B_pad = -(-B // 8) * 8
    tokens_p = jnp.zeros((B_pad,), jnp.int32).at[:B].set(tokens[:, 0])
    h0_p = jnp.pad(h0, ((0, 0), (0, B_pad - B), (0, 0)))

    # --- f32 matmul operands: should track the pure-JAX reference closely
    # (tolerance covers TPU default matmul precision + transcendental approx).
    prep32 = prepare_params(params, compute_dtype=jnp.float32)
    logits32, hid32 = simple_decoder_forward(tokens_p, h0_p, prep32)
    logits32 = jax.block_until_ready(logits32)
    hid32 = jax.block_until_ready(hid32)
    out32 = logits32[:B, :V]
    hidden32 = hid32[:, :B]
    assert out32.shape == (B, V) and hidden32.shape == (L, B, H)
    assert jnp.allclose(out32, ref_out, atol=2e-3, rtol=2e-3), \
        f"f32 logits max diff {jnp.max(jnp.abs(out32 - ref_out))}"
    assert jnp.allclose(hidden32, ref_hidden, atol=2e-3, rtol=2e-3), \
        f"f32 hidden max diff {jnp.max(jnp.abs(hidden32 - ref_hidden))}"

    # --- bf16 matmul operands (f32 accumulation, f32 gate math) for full MXU
    # rate on v6e/v7x; loose tolerance accounts for bf16 mantissa.
    prep16 = prepare_params(params, compute_dtype=jnp.bfloat16)
    logits16, hid16 = simple_decoder_forward(tokens_p, h0_p, prep16)
    logits16 = jax.block_until_ready(logits16)
    hid16 = jax.block_until_ready(hid16)
    out16 = logits16[:B, :V]
    hidden16 = hid16[:, :B]
    assert jnp.allclose(out16, ref_out, atol=1e-1, rtol=1e-1), \
        f"bf16 logits max diff {jnp.max(jnp.abs(out16 - ref_out))}"
    assert jnp.allclose(hidden16, ref_hidden, atol=1e-1, rtol=1e-1), \
        f"bf16 hidden max diff {jnp.max(jnp.abs(hidden16 - ref_hidden))}"

    print("KERNEL_OK")
</pallas_src>

<mosaic_0001>
module attributes {stable_mosaic.version = 11 : i64} {
  func.func @fused_decoder_kernel(%arg0: memref<8xi32, #tpu.memory_space<smem>>, %arg1: memref<256x128xf32, #tpu.memory_space<any>>, %arg2: memref<2x128x384xf32, #tpu.memory_space<vmem>>, %arg3: memref<2x128x384xf32, #tpu.memory_space<vmem>>, %arg4: memref<2x1x384xf32, #tpu.memory_space<vmem>>, %arg5: memref<2x1x384xf32, #tpu.memory_space<vmem>>, %arg6: memref<128x256xf32, #tpu.memory_space<vmem>>, %arg7: memref<1x256xf32, #tpu.memory_space<vmem>>, %arg8: memref<2x8x128xf32, #tpu.memory_space<vmem>>, %arg9: memref<2x8x128xf32, #tpu.memory_space<vmem>>, %arg10: memref<8x256xf32, #tpu.memory_space<vmem>>, %arg11: memref<8x128xf32, #tpu.memory_space<vmem>>, %arg12: memref<8x!tpu.dma_semaphore, #tpu.memory_space<semaphore_mem>>) attributes {dimension_semantics = [], scalar_prefetch = 0 : i64, scratch_operands = 2 : i64, tpu.core_type = #tpu.core_type<tc>} {
    %c0 = arith.constant 0 : index
    %0 = memref.load %arg0[%c0] : memref<8xi32, #tpu.memory_space<smem>>
    %c0_i32 = arith.constant 0 : i32
    %c0_i32_0 = arith.constant 0 : i32
    %1 = tpu.memref_slice %arg1[%0, %c0_i32_0] : memref<256x128xf32, #tpu.memory_space<any>> -> memref<1x128xf32, #tpu.memory_space<any>>
    %c0_i32_1 = arith.constant 0 : i32
    %c0_i32_2 = arith.constant 0 : i32
    %2 = tpu.memref_slice %arg11[%c0_i32_1, %c0_i32_2] : memref<8x128xf32, #tpu.memory_space<vmem>> -> memref<1x128xf32, #tpu.memory_space<vmem>>
    %3 = tpu.memref_slice %arg12[%c0_i32] : memref<8x!tpu.dma_semaphore, #tpu.memory_space<semaphore_mem>> -> memref<1x!tpu.dma_semaphore, #tpu.memory_space<semaphore_mem>>
    %4 = tpu.memref_squeeze %3 : memref<1x!tpu.dma_semaphore, #tpu.memory_space<semaphore_mem>> -> memref<!tpu.dma_semaphore, #tpu.memory_space<semaphore_mem>>
    tpu.enqueue_dma source(%1 : memref<1x128xf32, #tpu.memory_space<any>>) target(%2 : memref<1x128xf32, #tpu.memory_space<vmem>>) target_semaphore(%4 : memref<!tpu.dma_semaphore, #tpu.memory_space<semaphore_mem>>)
    %c1 = arith.constant 1 : index
    %5 = memref.load %arg0[%c1] : memref<8xi32, #tpu.memory_space<smem>>
    %c1_i32 = arith.constant 1 : i32
    %c0_i32_3 = arith.constant 0 : i32
    %6 = tpu.memref_slice %arg1[%5, %c0_i32_3] : memref<256x128xf32, #tpu.memory_space<any>> -> memref<1x128xf32, #tpu.memory_space<any>>
    %c1_i32_4 = arith.constant 1 : i32
    %c0_i32_5 = arith.constant 0 : i32
    %7 = tpu.memref_slice %arg11[%c1_i32_4, %c0_i32_5] : memref<8x128xf32, #tpu.memory_space<vmem>> -> memref<1x128xf32, #tpu.memory_space<vmem>>
    %8 = tpu.memref_slice %arg12[%c1_i32] : memref<8x!tpu.dma_semaphore, #tpu.memory_space<semaphore_mem>> -> memref<1x!tpu.dma_semaphore, #tpu.memory_space<semaphore_mem>>
    %9 = tpu.memref_squeeze %8 : memref<1x!tpu.dma_semaphore, #tpu.memory_space<semaphore_mem>> -> memref<!tpu.dma_semaphore, #tpu.memory_space<semaphore_mem>>
    tpu.enqueue_dma source(%6 : memref<1x128xf32, #tpu.memory_space<any>>) target(%7 : memref<1x128xf32, #tpu.memory_space<vmem>>) target_semaphore(%9 : memref<!tpu.dma_semaphore, #tpu.memory_space<semaphore_mem>>)
    %c2 = arith.constant 2 : index
    %10 = memref.load %arg0[%c2] : memref<8xi32, #tpu.memory_space<smem>>
    %c2_i32 = arith.constant 2 : i32
    %c0_i32_6 = arith.constant 0 : i32
    %11 = tpu.memref_slice %arg1[%10, %c0_i32_6] : memref<256x128xf32, #tpu.memory_space<any>> -> memref<1x128xf32, #tpu.memory_space<any>>
    %c2_i32_7 = arith.constant 2 : i32
    %c0_i32_8 = arith.constant 0 : i32
    %12 = tpu.memref_slice %arg11[%c2_i32_7, %c0_i32_8] : memref<8x128xf32, #tpu.memory_space<vmem>> -> memref<1x128xf32, #tpu.memory_space<vmem>>
    %13 = tpu.memref_slice %arg12[%c2_i32] : memref<8x!tpu.dma_semaphore, #tpu.memory_space<semaphore_mem>> -> memref<1x!tpu.dma_semaphore, #tpu.memory_space<semaphore_mem>>
    %14 = tpu.memref_squeeze %13 : memref<1x!tpu.dma_semaphore, #tpu.memory_space<semaphore_mem>> -> memref<!tpu.dma_semaphore, #tpu.memory_space<semaphore_mem>>
    tpu.enqueue_dma source(%11 : memref<1x128xf32, #tpu.memory_space<any>>) target(%12 : memref<1x128xf32, #tpu.memory_space<vmem>>) target_semaphore(%14 : memref<!tpu.dma_semaphore, #tpu.memory_space<semaphore_mem>>)
    %c3 = arith.constant 3 : index
    %15 = memref.load %arg0[%c3] : memref<8xi32, #tpu.memory_space<smem>>
    %c3_i32 = arith.constant 3 : i32
    %c0_i32_9 = arith.constant 0 : i32
    %16 = tpu.memref_slice %arg1[%15, %c0_i32_9] : memref<256x128xf32, #tpu.memory_space<any>> -> memref<1x128xf32, #tpu.memory_space<any>>
    %c3_i32_10 = arith.constant 3 : i32
    %c0_i32_11 = arith.constant 0 : i32
    %17 = tpu.memref_slice %arg11[%c3_i32_10, %c0_i32_11] : memref<8x128xf32, #tpu.memory_space<vmem>> -> memref<1x128xf32, #tpu.memory_space<vmem>>
    %18 = tpu.memref_slice %arg12[%c3_i32] : memref<8x!tpu.dma_semaphore, #tpu.memory_space<semaphore_mem>> -> memref<1x!tpu.dma_semaphore, #tpu.memory_space<semaphore_mem>>
    %19 = tpu.memref_squeeze %18 : memref<1x!tpu.dma_semaphore, #tpu.memory_space<semaphore_mem>> -> memref<!tpu.dma_semaphore, #tpu.memory_space<semaphore_mem>>
    tpu.enqueue_dma source(%16 : memref<1x128xf32, #tpu.memory_space<any>>) target(%17 : memref<1x128xf32, #tpu.memory_space<vmem>>) target_semaphore(%19 : memref<!tpu.dma_semaphore, #tpu.memory_space<semaphore_mem>>)
    %c4 = arith.constant 4 : index
    %20 = memref.load %arg0[%c4] : memref<8xi32, #tpu.memory_space<smem>>
    %c4_i32 = arith.constant 4 : i32
    %c0_i32_12 = arith.constant 0 : i32
    %21 = tpu.memref_slice %arg1[%20, %c0_i32_12] : memref<256x128xf32, #tpu.memory_space<any>> -> memref<1x128xf32, #tpu.memory_space<any>>
    %c4_i32_13 = arith.constant 4 : i32
    %c0_i32_14 = arith.constant 0 : i32
    %22 = tpu.memref_slice %arg11[%c4_i32_13, %c0_i32_14] : memref<8x128xf32, #tpu.memory_space<vmem>> -> memref<1x128xf32, #tpu.memory_space<vmem>>
    %23 = tpu.memref_slice %arg12[%c4_i32] : memref<8x!tpu.dma_semaphore, #tpu.memory_space<semaphore_mem>> -> memref<1x!tpu.dma_semaphore, #tpu.memory_space<semaphore_mem>>
    %24 = tpu.memref_squeeze %23 : memref<1x!tpu.dma_semaphore, #tpu.memory_space<semaphore_mem>> -> memref<!tpu.dma_semaphore, #tpu.memory_space<semaphore_mem>>
    tpu.enqueue_dma source(%21 : memref<1x128xf32, #tpu.memory_space<any>>) target(%22 : memref<1x128xf32, #tpu.memory_space<vmem>>) target_semaphore(%24 : memref<!tpu.dma_semaphore, #tpu.memory_space<semaphore_mem>>)
    %c5 = arith.constant 5 : index
    %25 = memref.load %arg0[%c5] : memref<8xi32, #tpu.memory_space<smem>>
    %c5_i32 = arith.constant 5 : i32
    %c0_i32_15 = arith.constant 0 : i32
    %26 = tpu.memref_slice %arg1[%25, %c0_i32_15] : memref<256x128xf32, #tpu.memory_space<any>> -> memref<1x128xf32, #tpu.memory_space<any>>
    %c5_i32_16 = arith.constant 5 : i32
    %c0_i32_17 = arith.constant 0 : i32
    %27 = tpu.memref_slice %arg11[%c5_i32_16, %c0_i32_17] : memref<8x128xf32, #tpu.memory_space<vmem>> -> memref<1x128xf32, #tpu.memory_space<vmem>>
    %28 = tpu.memref_slice %arg12[%c5_i32] : memref<8x!tpu.dma_semaphore, #tpu.memory_space<semaphore_mem>> -> memref<1x!tpu.dma_semaphore, #tpu.memory_space<semaphore_mem>>
    %29 = tpu.memref_squeeze %28 : memref<1x!tpu.dma_semaphore, #tpu.memory_space<semaphore_mem>> -> memref<!tpu.dma_semaphore, #tpu.memory_space<semaphore_mem>>
    tpu.enqueue_dma source(%26 : memref<1x128xf32, #tpu.memory_space<any>>) target(%27 : memref<1x128xf32, #tpu.memory_space<vmem>>) target_semaphore(%29 : memref<!tpu.dma_semaphore, #tpu.memory_space<semaphore_mem>>)
    %c6 = arith.constant 6 : index
    %30 = memref.load %arg0[%c6] : memref<8xi32, #tpu.memory_space<smem>>
    %c6_i32 = arith.constant 6 : i32
    %c0_i32_18 = arith.constant 0 : i32
    %31 = tpu.memref_slice %arg1[%30, %c0_i32_18] : memref<256x128xf32, #tpu.memory_space<any>> -> memref<1x128xf32, #tpu.memory_space<any>>
    %c6_i32_19 = arith.constant 6 : i32
    %c0_i32_20 = arith.constant 0 : i32
    %32 = tpu.memref_slice %arg11[%c6_i32_19, %c0_i32_20] : memref<8x128xf32, #tpu.memory_space<vmem>> -> memref<1x128xf32, #tpu.memory_space<vmem>>
    %33 = tpu.memref_slice %arg12[%c6_i32] : memref<8x!tpu.dma_semaphore, #tpu.memory_space<semaphore_mem>> -> memref<1x!tpu.dma_semaphore, #tpu.memory_space<semaphore_mem>>
    %34 = tpu.memref_squeeze %33 : memref<1x!tpu.dma_semaphore, #tpu.memory_space<semaphore_mem>> -> memref<!tpu.dma_semaphore, #tpu.memory_space<semaphore_mem>>
    tpu.enqueue_dma source(%31 : memref<1x128xf32, #tpu.memory_space<any>>) target(%32 : memref<1x128xf32, #tpu.memory_space<vmem>>) target_semaphore(%34 : memref<!tpu.dma_semaphore, #tpu.memory_space<semaphore_mem>>)
    %c7 = arith.constant 7 : index
    %35 = memref.load %arg0[%c7] : memref<8xi32, #tpu.memory_space<smem>>
    %c7_i32 = arith.constant 7 : i32
    %c0_i32_21 = arith.constant 0 : i32
    %36 = tpu.memref_slice %arg1[%35, %c0_i32_21] : memref<256x128xf32, #tpu.memory_space<any>> -> memref<1x128xf32, #tpu.memory_space<any>>
    %c7_i32_22 = arith.constant 7 : i32
    %c0_i32_23 = arith.constant 0 : i32
    %37 = tpu.memref_slice %arg11[%c7_i32_22, %c0_i32_23] : memref<8x128xf32, #tpu.memory_space<vmem>> -> memref<1x128xf32, #tpu.memory_space<vmem>>
    %38 = tpu.memref_slice %arg12[%c7_i32] : memref<8x!tpu.dma_semaphore, #tpu.memory_space<semaphore_mem>> -> memref<1x!tpu.dma_semaphore, #tpu.memory_space<semaphore_mem>>
    %39 = tpu.memref_squeeze %38 : memref<1x!tpu.dma_semaphore, #tpu.memory_space<semaphore_mem>> -> memref<!tpu.dma_semaphore, #tpu.memory_space<semaphore_mem>>
    tpu.enqueue_dma source(%36 : memref<1x128xf32, #tpu.memory_space<any>>) target(%37 : memref<1x128xf32, #tpu.memory_space<vmem>>) target_semaphore(%39 : memref<!tpu.dma_semaphore, #tpu.memory_space<semaphore_mem>>)
    %c0_i32_24 = arith.constant 0 : i32
    %c0_i32_25 = arith.constant 0 : i32
    %40 = tpu.memref_slice %arg1[%0, %c0_i32_25] : memref<256x128xf32, #tpu.memory_space<any>> -> memref<1x128xf32, #tpu.memory_space<any>>
    %c0_i32_26 = arith.constant 0 : i32
    %c0_i32_27 = arith.constant 0 : i32
    %41 = tpu.memref_slice %arg11[%c0_i32_26, %c0_i32_27] : memref<8x128xf32, #tpu.memory_space<vmem>> -> memref<1x128xf32, #tpu.memory_space<vmem>>
    %42 = tpu.memref_slice %arg12[%c0_i32_24] : memref<8x!tpu.dma_semaphore, #tpu.memory_space<semaphore_mem>> -> memref<1x!tpu.dma_semaphore, #tpu.memory_space<semaphore_mem>>
    %43 = tpu.memref_squeeze %42 : memref<1x!tpu.dma_semaphore, #tpu.memory_space<semaphore_mem>> -> memref<!tpu.dma_semaphore, #tpu.memory_space<semaphore_mem>>
    tpu.wait_dma2 semaphore(%43 : memref<!tpu.dma_semaphore, #tpu.memory_space<semaphore_mem>>) src(%40 : memref<1x128xf32, #tpu.memory_space<any>>) dst(%41 : memref<1x128xf32, #tpu.memory_space<vmem>>)
    %c1_i32_28 = arith.constant 1 : i32
    %c0_i32_29 = arith.constant 0 : i32
    %44 = tpu.memref_slice %arg1[%5, %c0_i32_29] : memref<256x128xf32, #tpu.memory_space<any>> -> memref<1x128xf32, #tpu.memory_space<any>>
    %c1_i32_30 = arith.constant 1 : i32
    %c0_i32_31 = arith.constant 0 : i32
    %45 = tpu.memref_slice %arg11[%c1_i32_30, %c0_i32_31] : memref<8x128xf32, #tpu.memory_space<vmem>> -> memref<1x128xf32, #tpu.memory_space<vmem>>
    %46 = tpu.memref_slice %arg12[%c1_i32_28] : memref<8x!tpu.dma_semaphore, #tpu.memory_space<semaphore_mem>> -> memref<1x!tpu.dma_semaphore, #tpu.memory_space<semaphore_mem>>
    %47 = tpu.memref_squeeze %46 : memref<1x!tpu.dma_semaphore, #tpu.memory_space<semaphore_mem>> -> memref<!tpu.dma_semaphore, #tpu.memory_space<semaphore_mem>>
    tpu.wait_dma2 semaphore(%47 : memref<!tpu.dma_semaphore, #tpu.memory_space<semaphore_mem>>) src(%44 : memref<1x128xf32, #tpu.memory_space<any>>) dst(%45 : memref<1x128xf32, #tpu.memory_space<vmem>>)
    %c2_i32_32 = arith.constant 2 : i32
    %c0_i32_33 = arith.constant 0 : i32
    %48 = tpu.memref_slice %arg1[%10, %c0_i32_33] : memref<256x128xf32, #tpu.memory_space<any>> -> memref<1x128xf32, #tpu.memory_space<any>>
    %c2_i32_34 = arith.constant 2 : i32
    %c0_i32_35 = arith.constant 0 : i32
    %49 = tpu.memref_slice %arg11[%c2_i32_34, %c0_i32_35] : memref<8x128xf32, #tpu.memory_space<vmem>> -> memref<1x128xf32, #tpu.memory_space<vmem>>
    %50 = tpu.memref_slice %arg12[%c2_i32_32] : memref<8x!tpu.dma_semaphore, #tpu.memory_space<semaphore_mem>> -> memref<1x!tpu.dma_semaphore, #tpu.memory_space<semaphore_mem>>
    %51 = tpu.memref_squeeze %50 : memref<1x!tpu.dma_semaphore, #tpu.memory_space<semaphore_mem>> -> memref<!tpu.dma_semaphore, #tpu.memory_space<semaphore_mem>>
    tpu.wait_dma2 semaphore(%51 : memref<!tpu.dma_semaphore, #tpu.memory_space<semaphore_mem>>) src(%48 : memref<1x128xf32, #tpu.memory_space<any>>) dst(%49 : memref<1x128xf32, #tpu.memory_space<vmem>>)
    %c3_i32_36 = arith.constant 3 : i32
    %c0_i32_37 = arith.constant 0 : i32
    %52 = tpu.memref_slice %arg1[%15, %c0_i32_37] : memref<256x128xf32, #tpu.memory_space<any>> -> memref<1x128xf32, #tpu.memory_space<any>>
    %c3_i32_38 = arith.constant 3 : i32
    %c0_i32_39 = arith.constant 0 : i32
    %53 = tpu.memref_slice %arg11[%c3_i32_38, %c0_i32_39] : memref<8x128xf32, #tpu.memory_space<vmem>> -> memref<1x128xf32, #tpu.memory_space<vmem>>
    %54 = tpu.memref_slice %arg12[%c3_i32_36] : memref<8x!tpu.dma_semaphore, #tpu.memory_space<semaphore_mem>> -> memref<1x!tpu.dma_semaphore, #tpu.memory_space<semaphore_mem>>
    %55 = tpu.memref_squeeze %54 : memref<1x!tpu.dma_semaphore, #tpu.memory_space<semaphore_mem>> -> memref<!tpu.dma_semaphore, #tpu.memory_space<semaphore_mem>>
    tpu.wait_dma2 semaphore(%55 : memref<!tpu.dma_semaphore, #tpu.memory_space<semaphore_mem>>) src(%52 : memref<1x128xf32, #tpu.memory_space<any>>) dst(%53 : memref<1x128xf32, #tpu.memory_space<vmem>>)
    %c4_i32_40 = arith.constant 4 : i32
    %c0_i32_41 = arith.constant 0 : i32
    %56 = tpu.memref_slice %arg1[%20, %c0_i32_41] : memref<256x128xf32, #tpu.memory_space<any>> -> memref<1x128xf32, #tpu.memory_space<any>>
    %c4_i32_42 = arith.constant 4 : i32
    %c0_i32_43 = arith.constant 0 : i32
    %57 = tpu.memref_slice %arg11[%c4_i32_42, %c0_i32_43] : memref<8x128xf32, #tpu.memory_space<vmem>> -> memref<1x128xf32, #tpu.memory_space<vmem>>
    %58 = tpu.memref_slice %arg12[%c4_i32_40] : memref<8x!tpu.dma_semaphore, #tpu.memory_space<semaphore_mem>> -> memref<1x!tpu.dma_semaphore, #tpu.memory_space<semaphore_mem>>
    %59 = tpu.memref_squeeze %58 : memref<1x!tpu.dma_semaphore, #tpu.memory_space<semaphore_mem>> -> memref<!tpu.dma_semaphore, #tpu.memory_space<semaphore_mem>>
    tpu.wait_dma2 semaphore(%59 : memref<!tpu.dma_semaphore, #tpu.memory_space<semaphore_mem>>) src(%56 : memref<1x128xf32, #tpu.memory_space<any>>) dst(%57 : memref<1x128xf32, #tpu.memory_space<vmem>>)
    %c5_i32_44 = arith.constant 5 : i32
    %c0_i32_45 = arith.constant 0 : i32
    %60 = tpu.memref_slice %arg1[%25, %c0_i32_45] : memref<256x128xf32, #tpu.memory_space<any>> -> memref<1x128xf32, #tpu.memory_space<any>>
    %c5_i32_46 = arith.constant 5 : i32
    %c0_i32_47 = arith.constant 0 : i32
    %61 = tpu.memref_slice %arg11[%c5_i32_46, %c0_i32_47] : memref<8x128xf32, #tpu.memory_space<vmem>> -> memref<1x128xf32, #tpu.memory_space<vmem>>
    %62 = tpu.memref_slice %arg12[%c5_i32_44] : memref<8x!tpu.dma_semaphore, #tpu.memory_space<semaphore_mem>> -> memref<1x!tpu.dma_semaphore, #tpu.memory_space<semaphore_mem>>
    %63 = tpu.memref_squeeze %62 : memref<1x!tpu.dma_semaphore, #tpu.memory_space<semaphore_mem>> -> memref<!tpu.dma_semaphore, #tpu.memory_space<semaphore_mem>>
    tpu.wait_dma2 semaphore(%63 : memref<!tpu.dma_semaphore, #tpu.memory_space<semaphore_mem>>) src(%60 : memref<1x128xf32, #tpu.memory_space<any>>) dst(%61 : memref<1x128xf32, #tpu.memory_space<vmem>>)
    %c6_i32_48 = arith.constant 6 : i32
    %c0_i32_49 = arith.constant 0 : i32
    %64 = tpu.memref_slice %arg1[%30, %c0_i32_49] : memref<256x128xf32, #tpu.memory_space<any>> -> memref<1x128xf32, #tpu.memory_space<any>>
    %c6_i32_50 = arith.constant 6 : i32
    %c0_i32_51 = arith.constant 0 : i32
    %65 = tpu.memref_slice %arg11[%c6_i32_50, %c0_i32_51] : memref<8x128xf32, #tpu.memory_space<vmem>> -> memref<1x128xf32, #tpu.memory_space<vmem>>
    %66 = tpu.memref_slice %arg12[%c6_i32_48] : memref<8x!tpu.dma_semaphore, #tpu.memory_space<semaphore_mem>> -> memref<1x!tpu.dma_semaphore, #tpu.memory_space<semaphore_mem>>
    %67 = tpu.memref_squeeze %66 : memref<1x!tpu.dma_semaphore, #tpu.memory_space<semaphore_mem>> -> memref<!tpu.dma_semaphore, #tpu.memory_space<semaphore_mem>>
    tpu.wait_dma2 semaphore(%67 : memref<!tpu.dma_semaphore, #tpu.memory_space<semaphore_mem>>) src(%64 : memref<1x128xf32, #tpu.memory_space<any>>) dst(%65 : memref<1x128xf32, #tpu.memory_space<vmem>>)
    %c7_i32_52 = arith.constant 7 : i32
    %c0_i32_53 = arith.constant 0 : i32
    %68 = tpu.memref_slice %arg1[%35, %c0_i32_53] : memref<256x128xf32, #tpu.memory_space<any>> -> memref<1x128xf32, #tpu.memory_space<any>>
    %c7_i32_54 = arith.constant 7 : i32
    %c0_i32_55 = arith.constant 0 : i32
    %69 = tpu.memref_slice %arg11[%c7_i32_54, %c0_i32_55] : memref<8x128xf32, #tpu.memory_space<vmem>> -> memref<1x128xf32, #tpu.memory_space<vmem>>
    %70 = tpu.memref_slice %arg12[%c7_i32_52] : memref<8x!tpu.dma_semaphore, #tpu.memory_space<semaphore_mem>> -> memref<1x!tpu.dma_semaphore, #tpu.memory_space<semaphore_mem>>
    %71 = tpu.memref_squeeze %70 : memref<1x!tpu.dma_semaphore, #tpu.memory_space<semaphore_mem>> -> memref<!tpu.dma_semaphore, #tpu.memory_space<semaphore_mem>>
    tpu.wait_dma2 semaphore(%71 : memref<!tpu.dma_semaphore, #tpu.memory_space<semaphore_mem>>) src(%68 : memref<1x128xf32, #tpu.memory_space<any>>) dst(%69 : memref<1x128xf32, #tpu.memory_space<vmem>>)
    %c0_56 = arith.constant 0 : index
    %c0_57 = arith.constant 0 : index
    %72 = vector.load %arg11[%c0_56, %c0_57] : memref<8x128xf32, #tpu.memory_space<vmem>>, vector<8x128xf32>
    %c0_58 = arith.constant 0 : index
    %c0_59 = arith.constant 0 : index
    %c0_60 = arith.constant 0 : index
    %73 = vector.load %arg8[%c0_58, %c0_59, %c0_60] : memref<2x8x128xf32, #tpu.memory_space<vmem>>, vector<1x8x128xf32>
    %74 = vector.shape_cast %73 : vector<1x8x128xf32> to vector<8x128xf32>
    %c0_61 = arith.constant 0 : index
    %c0_62 = arith.constant 0 : index
    %c0_63 = arith.constant 0 : index
    %75 = vector.load %arg2[%c0_61, %c0_62, %c0_63] : memref<2x128x384xf32, #tpu.memory_space<vmem>>, vector<1x128x384xf32>
    %76 = vector.shape_cast %75 : vector<1x128x384xf32> to vector<128x384xf32>
    %cst = arith.constant dense<0.000000e+00> : vector<8x384xf32>
    %77 = tpu.matmul %72, %76, %cst {dimension_numbers = #tpu.dot_dimension_numbers<[1], [0], [0], [1], [0, 0, 1, 1], [], []>} : vector<8x128xf32>, vector<128x384xf32>, vector<8x384xf32> -> vector<8x384xf32>
    %c0_64 = arith.constant 0 : index
    %c0_65 = arith.constant 0 : index
    %c0_66 = arith.constant 0 : index
    %78 = vector.load %arg4[%c0_64, %c0_65, %c0_66] : memref<2x1x384xf32, #tpu.memory_space<vmem>>, vector<1x1x384xf32>
    %79 = vector.shape_cast %78 : vector<1x1x384xf32> to vector<1x384xf32>
    %80 = vector.broadcast %79 : vector<1x384xf32> to vector<8x384xf32>
    %81 = arith.addf %77, %80 : vector<8x384xf32>
    %c0_67 = arith.constant 0 : index
    %c0_68 = arith.constant 0 : index
    %c0_69 = arith.constant 0 : index
    %82 = vector.load %arg3[%c0_67, %c0_68, %c0_69] : memref<2x128x384xf32, #tpu.memory_space<vmem>>, vector<1x128x384xf32>
    %83 = vector.shape_cast %82 : vector<1x128x384xf32> to vector<128x384xf32>
    %cst_70 = arith.constant dense<0.000000e+00> : vector<8x384xf32>
    %84 = tpu.matmul %74, %83, %cst_70 {dimension_numbers = #tpu.dot_dimension_numbers<[1], [0], [0], [1], [0, 0, 1, 1], [], []>} : vector<8x128xf32>, vector<128x384xf32>, vector<8x384xf32> -> vector<8x384xf32>
    %c0_71 = arith.constant 0 : index
    %c0_72 = arith.constant 0 : index
    %c0_73 = arith.constant 0 : index
    %85 = vector.load %arg5[%c0_71, %c0_72, %c0_73] : memref<2x1x384xf32, #tpu.memory_space<vmem>>, vector<1x1x384xf32>
    %86 = vector.shape_cast %85 : vector<1x1x384xf32> to vector<1x384xf32>
    %87 = vector.broadcast %86 : vector<1x384xf32> to vector<8x384xf32>
    %88 = arith.addf %84, %87 : vector<8x384xf32>
    %89 = vector.extract_strided_slice %81 {offsets = [0, 0], sizes = [8, 128], strides = [1, 1]} : vector<8x384xf32> to vector<8x128xf32>
    %90 = vector.extract_strided_slice %88 {offsets = [0, 0], sizes = [8, 128], strides = [1, 1]} : vector<8x384xf32> to vector<8x128xf32>
    %91 = arith.addf %89, %90 : vector<8x128xf32>
    %92 = arith.negf %91 : vector<8x128xf32>
    %93 = math.exp %92 : vector<8x128xf32>
    %cst_74 = arith.constant 1.000000e+00 : f32
    %94 = vector.broadcast %cst_74 : f32 to vector<8x128xf32>
    %95 = arith.addf %94, %93 : vector<8x128xf32>
    %96 = arith.divf %94, %95 : vector<8x128xf32>
    %97 = vector.extract_strided_slice %81 {offsets = [0, 128], sizes = [8, 128], strides = [1, 1]} : vector<8x384xf32> to vector<8x128xf32>
    %98 = vector.extract_strided_slice %88 {offsets = [0, 128], sizes = [8, 128], strides = [1, 1]} : vector<8x384xf32> to vector<8x128xf32>
    %99 = arith.addf %97, %98 : vector<8x128xf32>
    %100 = arith.negf %99 : vector<8x128xf32>
    %101 = math.exp %100 : vector<8x128xf32>
    %cst_75 = arith.constant 1.000000e+00 : f32
    %102 = vector.broadcast %cst_75 : f32 to vector<8x128xf32>
    %103 = arith.addf %102, %101 : vector<8x128xf32>
    %104 = arith.divf %102, %103 : vector<8x128xf32>
    %105 = vector.extract_strided_slice %81 {offsets = [0, 256], sizes = [8, 128], strides = [1, 1]} : vector<8x384xf32> to vector<8x128xf32>
    %106 = vector.extract_strided_slice %88 {offsets = [0, 256], sizes = [8, 128], strides = [1, 1]} : vector<8x384xf32> to vector<8x128xf32>
    %107 = arith.mulf %96, %106 : vector<8x128xf32>
    %108 = arith.addf %105, %107 : vector<8x128xf32>
    %109 = math.tanh %108 : vector<8x128xf32>
    %cst_76 = arith.constant 1.000000e+00 : f32
    %110 = vector.broadcast %cst_76 : f32 to vector<8x128xf32>
    %111 = arith.subf %110, %104 : vector<8x128xf32>
    %112 = arith.mulf %111, %109 : vector<8x128xf32>
    %113 = arith.mulf %104, %74 : vector<8x128xf32>
    %114 = arith.addf %112, %113 : vector<8x128xf32>
    %c0_77 = arith.constant 0 : index
    %c0_78 = arith.constant 0 : index
    %c0_79 = arith.constant 0 : index
    %115 = vector.load %arg9[%c0_77, %c0_78, %c0_79] : memref<2x8x128xf32, #tpu.memory_space<vmem>>, vector<1x8x128xf32>
    %116 = vector.shape_cast %115 : vector<1x8x128xf32> to vector<8x128xf32>
    %117 = vector.shape_cast %114 : vector<8x128xf32> to vector<1x8x128xf32>
    tpu.vector_store %arg9[%c0_77, %c0_78, %c0_79], %117 {strides = array<i32>} : memref<2x8x128xf32, #tpu.memory_space<vmem>>, vector<1x8x128xf32>,
    %c1_80 = arith.constant 1 : index
    %c0_81 = arith.constant 0 : index
    %c0_82 = arith.constant 0 : index
    %118 = vector.load %arg8[%c1_80, %c0_81, %c0_82] : memref<2x8x128xf32, #tpu.memory_space<vmem>>, vector<1x8x128xf32>
    %119 = vector.shape_cast %118 : vector<1x8x128xf32> to vector<8x128xf32>
    %c1_83 = arith.constant 1 : index
    %c0_84 = arith.constant 0 : index
    %c0_85 = arith.constant 0 : index
    %120 = vector.load %arg2[%c1_83, %c0_84, %c0_85] : memref<2x128x384xf32, #tpu.memory_space<vmem>>, vector<1x128x384xf32>
    %121 = vector.shape_cast %120 : vector<1x128x384xf32> to vector<128x384xf32>
    %cst_86 = arith.constant dense<0.000000e+00> : vector<8x384xf32>
    %122 = tpu.matmul %114, %121, %cst_86 {dimension_numbers = #tpu.dot_dimension_numbers<[1], [0], [0], [1], [0, 0, 1, 1], [], []>} : vector<8x128xf32>, vector<128x384xf32>, vector<8x384xf32> -> vector<8x384xf32>
    %c1_87 = arith.constant 1 : index
    %c0_88 = arith.constant 0 : index
    %c0_89 = arith.constant 0 : index
    %123 = vector.load %arg4[%c1_87, %c0_88, %c0_89] : memref<2x1x384xf32, #tpu.memory_space<vmem>>, vector<1x1x384xf32>
    %124 = vector.shape_cast %123 : vector<1x1x384xf32> to vector<1x384xf32>
    %125 = vector.broadcast %124 : vector<1x384xf32> to vector<8x384xf32>
    %126 = arith.addf %122, %125 : vector<8x384xf32>
    %c1_90 = arith.constant 1 : index
    %c0_91 = arith.constant 0 : index
    %c0_92 = arith.constant 0 : index
    %127 = vector.load %arg3[%c1_90, %c0_91, %c0_92] : memref<2x128x384xf32, #tpu.memory_space<vmem>>, vector<1x128x384xf32>
    %128 = vector.shape_cast %127 : vector<1x128x384xf32> to vector<128x384xf32>
    %cst_93 = arith.constant dense<0.000000e+00> : vector<8x384xf32>
    %129 = tpu.matmul %119, %128, %cst_93 {dimension_numbers = #tpu.dot_dimension_numbers<[1], [0], [0], [1], [0, 0, 1, 1], [], []>} : vector<8x128xf32>, vector<128x384xf32>, vector<8x384xf32> -> vector<8x384xf32>
    %c1_94 = arith.constant 1 : index
    %c0_95 = arith.constant 0 : index
    %c0_96 = arith.constant 0 : index
    %130 = vector.load %arg5[%c1_94, %c0_95, %c0_96] : memref<2x1x384xf32, #tpu.memory_space<vmem>>, vector<1x1x384xf32>
    %131 = vector.shape_cast %130 : vector<1x1x384xf32> to vector<1x384xf32>
    %132 = vector.broadcast %131 : vector<1x384xf32> to vector<8x384xf32>
    %133 = arith.addf %129, %132 : vector<8x384xf32>
    %134 = vector.extract_strided_slice %126 {offsets = [0, 0], sizes = [8, 128], strides = [1, 1]} : vector<8x384xf32> to vector<8x128xf32>
    %135 = vector.extract_strided_slice %133 {offsets = [0, 0], sizes = [8, 128], strides = [1, 1]} : vector<8x384xf32> to vector<8x128xf32>
    %136 = arith.addf %134, %135 : vector<8x128xf32>
    %137 = arith.negf %136 : vector<8x128xf32>
    %138 = math.exp %137 : vector<8x128xf32>
    %cst_97 = arith.constant 1.000000e+00 : f32
    %139 = vector.broadcast %cst_97 : f32 to vector<8x128xf32>
    %140 = arith.addf %139, %138 : vector<8x128xf32>
    %141 = arith.divf %139, %140 : vector<8x128xf32>
    %142 = vector.extract_strided_slice %126 {offsets = [0, 128], sizes = [8, 128], strides = [1, 1]} : vector<8x384xf32> to vector<8x128xf32>
    %143 = vector.extract_strided_slice %133 {offsets = [0, 128], sizes = [8, 128], strides = [1, 1]} : vector<8x384xf32> to vector<8x128xf32>
    %144 = arith.addf %142, %143 : vector<8x128xf32>
    %145 = arith.negf %144 : vector<8x128xf32>
    %146 = math.exp %145 : vector<8x128xf32>
    %cst_98 = arith.constant 1.000000e+00 : f32
    %147 = vector.broadcast %cst_98 : f32 to vector<8x128xf32>
    %148 = arith.addf %147, %146 : vector<8x128xf32>
    %149 = arith.divf %147, %148 : vector<8x128xf32>
    %150 = vector.extract_strided_slice %126 {offsets = [0, 256], sizes = [8, 128], strides = [1, 1]} : vector<8x384xf32> to vector<8x128xf32>
    %151 = vector.extract_strided_slice %133 {offsets = [0, 256], sizes = [8, 128], strides = [1, 1]} : vector<8x384xf32> to vector<8x128xf32>
    %152 = arith.mulf %141, %151 : vector<8x128xf32>
    %153 = arith.addf %150, %152 : vector<8x128xf32>
    %154 = math.tanh %153 : vector<8x128xf32>
    %cst_99 = arith.constant 1.000000e+00 : f32
    %155 = vector.broadcast %cst_99 : f32 to vector<8x128xf32>
    %156 = arith.subf %155, %149 : vector<8x128xf32>
    %157 = arith.mulf %156, %154 : vector<8x128xf32>
    %158 = arith.mulf %149, %119 : vector<8x128xf32>
    %159 = arith.addf %157, %158 : vector<8x128xf32>
    %c1_100 = arith.constant 1 : index
    %c0_101 = arith.constant 0 : index
    %c0_102 = arith.constant 0 : index
    %160 = vector.load %arg9[%c1_100, %c0_101, %c0_102] : memref<2x8x128xf32, #tpu.memory_space<vmem>>, vector<1x8x128xf32>
    %161 = vector.shape_cast %160 : vector<1x8x128xf32> to vector<8x128xf32>
    %162 = vector.shape_cast %159 : vector<8x128xf32> to vector<1x8x128xf32>
    tpu.vector_store %arg9[%c1_100, %c0_101, %c0_102], %162 {strides = array<i32>} : memref<2x8x128xf32, #tpu.memory_space<vmem>>, vector<1x8x128xf32>,
    %c0_103 = arith.constant 0 : index
    %c0_104 = arith.constant 0 : index
    %163 = vector.load %arg6[%c0_103, %c0_104] : memref<128x256xf32, #tpu.memory_space<vmem>>, vector<128x256xf32>
    %cst_105 = arith.constant dense<0.000000e+00> : vector<8x256xf32>
    %164 = tpu.matmul %159, %163, %cst_105 {dimension_numbers = #tpu.dot_dimension_numbers<[1], [0], [0], [1], [0, 0, 1, 1], [], []>} : vector<8x128xf32>, vector<128x256xf32>, vector<8x256xf32> -> vector<8x256xf32>
    %c0_106 = arith.constant 0 : index
    %c0_107 = arith.constant 0 : index
    %165 = vector.load %arg7[%c0_106, %c0_107] : memref<1x256xf32, #tpu.memory_space<vmem>>, vector<1x256xf32>
    %166 = vector.broadcast %165 : vector<1x256xf32> to vector<8x256xf32>
    %167 = arith.addf %164, %166 : vector<8x256xf32>
    %c0_108 = arith.constant 0 : index
    %c0_109 = arith.constant 0 : index
    %168 = vector.load %arg10[%c0_108, %c0_109] : memref<8x256xf32, #tpu.memory_space<vmem>>, vector<8x256xf32>
    tpu.vector_store %arg10[%c0_108, %c0_109], %167 {strides = array<i32>} : memref<8x256xf32, #tpu.memory_space<vmem>>, vector<8x256xf32>,
    return
  }
}

</mosaic_0001>

<llo_original>
// kernel: simple_decoder_forward.1
$region0: #{simple_decoder_forward.1}
  #allocation0 [shape = 'u32[]', space=smem, size = 0x4, offset = 0x4, fixed_abs, tag = 'smem constant byte address 0x4 - core index']
  #allocation1 [shape = 'u32[144,128]{1,0:T(1,128)}', space=vmem, size = 0x12000, scoped, tag = 'internal scratch']
  #allocation2 [shape = 'f32[8,128]{1,0:T(8,128)}', space=vmem, size = 0x1000, scoped, tag = 'scratch operand']
  #allocation3 [shape = 's32[8]{0}', space=sflag, size = 0x20, scoped, tag = 'scratch operand']
  #allocation13 [shape = 's32[]', space=sflag, size = 0x4, offset = 0, fixed_abs, tag = 'sflag constant byte address 0x0 - dummy sync flag']
  #allocation14 [shape = 's32[]', space=sflag, size = 0x4, offset = 0, fixed_abs, tag = 'sflag constant byte address 0x0 - dummy sync flag']
  #allocation15 [shape = 'u32[]', space=smem, size = 0x4, offset = 0x44, fixed_abs, tag = 'smem constant byte address 0x44 - assertion arg 0']
  #allocation16 [shape = 'u32[]', space=smem, size = 0x4, offset = 0x48, fixed_abs, tag = 'smem constant byte address 0x48 - assertion arg 1']
  #allocation17 [shape = 's32[]', space=sflag, size = 0x4, offset = 0, fixed_abs, tag = 'sflag constant byte address 0x0 - dummy sync flag']
  #allocation18 [shape = 's32[]', space=sflag, size = 0x4, offset = 0, fixed_abs, tag = 'sflag constant byte address 0x0 - dummy sync flag']
  #allocation19 [shape = 's32[]', space=sflag, size = 0x4, offset = 0, fixed_abs, tag = 'sflag constant byte address 0x0 - dummy sync flag']
  #allocation20 [shape = 's32[]', space=sflag, size = 0x4, offset = 0, fixed_abs, tag = 'sflag constant byte address 0x0 - dummy sync flag']
  #allocation21 [shape = 's32[]', space=sflag, size = 0x4, offset = 0, fixed_abs, tag = 'sflag constant byte address 0x0 - dummy sync flag']
  #allocation22 [shape = 's32[]', space=sflag, size = 0x4, offset = 0, fixed_abs, tag = 'sflag constant byte address 0x0 - dummy sync flag']
  #allocation23 [shape = 's32[]', space=sflag, size = 0x4, offset = 0, fixed_abs, tag = 'sflag constant byte address 0x0 - dummy sync flag']
  #allocation24 [shape = 's32[]', space=sflag, size = 0x4, offset = 0, fixed_abs, tag = 'sflag constant byte address 0x0 - dummy sync flag']
  #allocation25 [shape = 's32[]', space=sflag, size = 0x4, offset = 0, fixed_abs, tag = 'sflag constant byte address 0x0 - dummy sync flag']
  #allocation26 [shape = 's32[]', space=sflag, size = 0x4, offset = 0, fixed_abs, tag = 'sflag constant byte address 0x0 - dummy sync flag']
  #allocation27 [shape = 's32[]', space=sflag, size = 0x4, offset = 0, fixed_abs, tag = 'sflag constant byte address 0x0 - dummy sync flag']
  #allocation28 [shape = 's32[]', space=sflag, size = 0x4, offset = 0, fixed_abs, tag = 'sflag constant byte address 0x0 - dummy sync flag']
  #allocation29 [shape = 's32[]', space=sflag, size = 0x4, offset = 0, fixed_abs, tag = 'sflag constant byte address 0x0 - dummy sync flag']
  #allocation30 [shape = 's32[]', space=sflag, size = 0x4, offset = 0, fixed_abs, tag = 'sflag constant byte address 0x0 - dummy sync flag']
  %s0 = inlined_call_operand.vmem [shape: s32[8], index: 0, kind: input, shape index: {}]
  %s1 = inlined_call_operand.hbm [shape: f32[256,128], index: 1, kind: input, shape index: {}]
  %s2 = inlined_call_operand.hbm [shape: f32[2,128,384], index: 2, kind: input, shape index: {}]
  %s3 = inlined_call_operand.hbm [shape: f32[2,128,384], index: 3, kind: input, shape index: {}]
  %s4 = inlined_call_operand.vmem [shape: f32[2,1,384], index: 4, kind: input, shape index: {}]
  %s5 = inlined_call_operand.vmem [shape: f32[2,1,384], index: 5, kind: input, shape index: {}]
  %s6 = inlined_call_operand.hbm [shape: f32[128,256], index: 6, kind: input, shape index: {}]
  %s7 = inlined_call_operand.vmem [shape: f32[1,256], index: 7, kind: input, shape index: {}]
  %s8 = inlined_call_operand.vmem [shape: f32[2,8,128], index: 8, kind: input, shape index: {}, may-alias: {8,9}]
  %s9 = inlined_call_operand.vmem [shape: f32[2,8,128], index: 9, kind: output, shape index: {0}, may-alias: {8,9}]
  %s10 = inlined_call_operand.hbm [shape: f32[8,256], index: 10, kind: output, shape index: {1}]
  %11 = xla_tuple %s9, %s10
  %s12 = sld [smem:[#allocation0]]
  $region98: #{simple_decoder_forward.1} parent=0
    _
  %s14 = ssub.s32 1, %s12
  %s15 = scalar_select 0, %s14, %s12
  $region1: #{simple_decoder_forward.1} parent=0
    #allocation4 [shape = 'u8[512]{0}', space=smem, size = 0x200, scoped, tag = 'input window, operand 0, single buffered']
    #allocation5 [shape = 's32[1]{0}', space=sflag, size = 0x4, scoped, tag = 'scoped memory for simple_decoder_forward.1']
    #allocation6 [shape = 's32[1]{0}', space=sflag, size = 0x4, scoped, tag = 'scoped memory for simple_decoder_forward.1']
    #allocation7 [shape = 's32[1]{0}', space=sflag, size = 0x4, scoped, tag = 'scoped memory for simple_decoder_forward.1']
    #allocation8 [shape = 'u8[393216]{0}', space=vmem, size = 0x60000, scoped, tag = 'input window, operand 2, single buffered']
    #allocation9 [shape = 'u8[393216]{0}', space=vmem, size = 0x60000, scoped, tag = 'input window, operand 3, single buffered']
    #allocation10 [shape = 's32[1]{0}', space=sflag, size = 0x4, scoped, tag = 'scoped memory for simple_decoder_forward.1']
    #allocation11 [shape = 'u8[131072]{0}', space=vmem, size = 0x20000, scoped, tag = 'input window, operand 6, single buffered']
    #allocation12 [shape = 'u8[8192]{0}', space=vmem, size = 0x2000, scoped, tag = 'output window, operand 1, single buffered']
    %16 = vsyncpa [#allocation7], 0
    %17 = vsyncpa [#allocation5], 0
    %18 = vsyncpa [#allocation10], 0
    %19 = vsyncpa [#allocation6], 0
    // Predicated region
    $region2: #{simple_decoder_forward.1} parent=1 // pred_check
      _
    $region3: #{simple_decoder_forward.1} parent=1 // pred_check_branch
      %21 = sbr.rel (0) target = $region5
    $region4: #{simple_decoder_forward.1} parent=1 // pred_region
      %s23 = ssub.s32 16, 16
      %24 = vsyncadd [#allocation7], %s23
      %s26 = sshll.u32 %s0, 4
      %s27 = int_to_ptr.vmem [resolvable:$true] %s26
      %29 = dma.vmem_to_smem %s27, 16, [#allocation4], [#allocation7]
    $region5: #{simple_decoder_forward.1} parent=1 // pred_fallthru
      _
    // Predicated region
    $region6: #{simple_decoder_forward.1} parent=1 // pred_check
      _
    $region7: #{simple_decoder_forward.1} parent=1 // pred_check_branch
      %31 = sbr.rel (0) target = $region9
    $region8: #{simple_decoder_forward.1} parent=1 // pred_region
      %s33 = ssub.s32 12288, 12288
      %34 = vsyncadd [#allocation5], %s33
      %s35 = sshll.u32 [#allocation8], 4
      %s36 = int_to_ptr.vmem [resolvable:$true] %s35
      %41 = dma.hbm_to_vmem [thread:$0]  %s2, 12288, %s36, [#allocation5], 384, 384, 24
    $region9: #{simple_decoder_forward.1} parent=1 // pred_fallthru
      _
    // Predicated region
    $region10: #{simple_decoder_forward.1} parent=1 // pred_check
      _
    $region11: #{simple_decoder_forward.1} parent=1 // pred_check_branch
      %43 = sbr.rel (0) target = $region13
    $region12: #{simple_decoder_forward.1} parent=1 // pred_region
      %s45 = ssub.s32 12288, 12288
      %46 = vsyncadd [#allocation10], %s45
      %s47 = sshll.u32 [#allocation9], 4
      %s48 = int_to_ptr.vmem [resolvable:$true] %s47
      %53 = dma.hbm_to_vmem [thread:$0]  %s3, 12288, %s48, [#allocation10], 384, 384, 24
    $region13: #{simple_decoder_forward.1} parent=1 // pred_fallthru
      _
    // Predicated region
    $region14: #{simple_decoder_forward.1} parent=1 // pred_check
      _
    $region15: #{simple_decoder_forward.1} parent=1 // pred_check_branch
      %55 = sbr.rel (0) target = $region17
    $region16: #{simple_decoder_forward.1} parent=1 // pred_region
      _
    $region17: #{simple_decoder_forward.1} parent=1 // pred_fallthru
      _
    // Predicated region
    $region18: #{simple_decoder_forward.1} parent=1 // pred_check
      _
    $region19: #{simple_decoder_forward.1} parent=1 // pred_check_branch
      %57 = sbr.rel (0) target = $region21
    $region20: #{simple_decoder_forward.1} parent=1 // pred_region
      _
    $region21: #{simple_decoder_forward.1} parent=1 // pred_fallthru
      _
    // Predicated region
    $region22: #{simple_decoder_forward.1} parent=1 // pred_check
      _
    $region23: #{simple_decoder_forward.1} parent=1 // pred_check_branch
      %59 = sbr.rel (0) target = $region25
    $region24: #{simple_decoder_forward.1} parent=1 // pred_region
      %s61 = ssub.s32 4096, 4096
      %62 = vsyncadd [#allocation10], %s61
      %s63 = sshll.u32 [#allocation11], 4
      %s64 = int_to_ptr.vmem [resolvable:$true] %s63
      %69 = dma.hbm_to_vmem [thread:$0]  %s6, 4096, %s64, [#allocation10], 256, 256, 16
    $region25: #{simple_decoder_forward.1} parent=1 // pred_fallthru
      _
    // Predicated region
    $region26: #{simple_decoder_forward.1} parent=1 // pred_check
      _
    $region27: #{simple_decoder_forward.1} parent=1 // pred_check_branch
      %71 = sbr.rel (0) target = $region29
    $region28: #{simple_decoder_forward.1} parent=1 // pred_region
      _
    $region29: #{simple_decoder_forward.1} parent=1 // pred_fallthru
      _
    // Predicated region
    $region30: #{simple_decoder_forward.1} parent=1 // pred_check
      _
    $region31: #{simple_decoder_forward.1} parent=1 // pred_check_branch
      %73 = sbr.rel (0) target = $region33
    $region32: #{simple_decoder_forward.1} parent=1 // pred_region
      _
    $region33: #{simple_decoder_forward.1} parent=1 // pred_fallthru
      _
    // Predicated region
    $region34: #{simple_decoder_forward.1} parent=1 // pred_check
      _
    $region35: #{simple_decoder_forward.1} parent=1 // pred_check_branch
      %75 = sbr.rel (0) target = $region37
    $region36: #{simple_decoder_forward.1} parent=1 // pred_region
      %76 = dma.done [#allocation7], 16
    $region37: #{simple_decoder_forward.1} parent=1 // pred_fallthru
      _
    // Predicated region
    $region38: #{simple_decoder_forward.1} parent=1 // pred_check
      _
    $region39: #{simple_decoder_forward.1} parent=1 // pred_check_branch
      %78 = sbr.rel (0) target = $region41
    $region40: #{simple_decoder_forward.1} parent=1 // pred_region
      %79 = dma.done [#allocation5], 12288
    $region41: #{simple_decoder_forward.1} parent=1 // pred_fallthru
      _
    // Predicated region
    $region42: #{simple_decoder_forward.1} parent=1 // pred_check
      _
    $region43: #{simple_decoder_forward.1} parent=1 // pred_check_branch
      %81 = sbr.rel (0) target = $region45
    $region44: #{simple_decoder_forward.1} parent=1 // pred_region
      %82 = dma.done [#allocation10], 12288
    $region45: #{simple_decoder_forward.1} parent=1 // pred_fallthru
      _
    // Predicated region
    $region46: #{simple_decoder_forward.1} parent=1 // pred_check
      _
    $region47: #{simple_decoder_forward.1} parent=1 // pred_check_branch
      %84 = sbr.rel (0) target = $region49
    $region48: #{simple_decoder_forward.1} parent=1 // pred_region
      %85 = dma.done [#allocation10], 4096
    $region49: #{simple_decoder_forward.1} parent=1 // pred_fallthru
      _
    %86 = sfence
    %s87 = sld [smem:[#allocation4]]
    %s88 = smul.addr %s87, 16
    %s89 = scalar_lea.hbm %s1, %s88
    // Predicated region
    $region50: #{simple_decoder_forward.1} parent=1 // pred_check
      _
    $region51: #{simple_decoder_forward.1} parent=1 // pred_check_branch
      %91 = sbr.rel target = $region53
    $region52: #{simple_decoder_forward.1} parent=1 // pred_region
      %92 = sst [smem:[#allocation15]] [#allocation14]
      %93 = sst [smem:[#allocation16]] [#allocation13]
    $region53: #{simple_decoder_forward.1} parent=1 // pred_fallthru
      _
    %95 = shalt.err (0)
    %s97 = sshll.u32 [#allocation2], 4
    %s98 = int_to_ptr.vmem [resolvable:$true] %s97
    %100 = dma.hbm_to_vmem [thread:$0]  %s89, 16, %s98, [#allocation3]
    %s101 = sld [smem:[#allocation4 + $0x1]]
    %s102 = smul.addr %s101, 16
    %s103 = scalar_lea.hbm %s1, %s102
    %s104 = scalar_lea.vmem [#allocation2], 1
    %s105 = scalar_lea.sflag [#allocation3], 1
    // Predicated region
    $region54: #{simple_decoder_forward.1} parent=1 // pred_check
      _
    $region55: #{simple_decoder_forward.1} parent=1 // pred_check_branch
      %107 = sbr.rel target = $region57
    $region56: #{simple_decoder_forward.1} parent=1 // pred_region
      %108 = sst [smem:[#allocation15]] [#allocation18]
      %109 = sst [smem:[#allocation16]] [#allocation17]
    $region57: #{simple_decoder_forward.1} parent=1 // pred_fallthru
      _
    %111 = shalt.err (0)
    %s113 = sshll.u32 %s104, 4
    %s114 = int_to_ptr.vmem [resolvable:$true] %s113
    %116 = dma.hbm_to_vmem [thread:$0]  %s103, 16, %s114, %s105
    %s117 = sld [smem:[#allocation4 + $0x2]]
    %s118 = smul.addr %s117, 16
    %s119 = scalar_lea.hbm %s1, %s118
    %s120 = scalar_lea.vmem [#allocation2], 2
    %s121 = scalar_lea.sflag [#allocation3], 2
    // Predicated region
    $region58: #{simple_decoder_forward.1} parent=1 // pred_check
      _
    $region59: #{simple_decoder_forward.1} parent=1 // pred_check_branch
      %123 = sbr.rel target = $region61
    $region60: #{simple_decoder_forward.1} parent=1 // pred_region
      %124 = sst [smem:[#allocation15]] [#allocation20]
      %125 = sst [smem:[#allocation16]] [#allocation19]
    $region61: #{simple_decoder_forward.1} parent=1 // pred_fallthru
      _
    %127 = shalt.err (0)
    %s129 = sshll.u32 %s120, 4
    %s130 = int_to_ptr.vmem [resolvable:$true] %s129
    %132 = dma.hbm_to_vmem [thread:$0]  %s119, 16, %s130, %s121
    %s133 = sld [smem:[#allocation4 + $0x3]]
    %s134 = smul.addr %s133, 16
    %s135 = scalar_lea.hbm %s1, %s134
    %s136 = scalar_lea.vmem [#allocation2], 3
    %s137 = scalar_lea.sflag [#allocation3], 3
    // Predicated region
    $region62: #{simple_decoder_forward.1} parent=1 // pred_check
      _
    $region63: #{simple_decoder_forward.1} parent=1 // pred_check_branch
      %139 = sbr.rel target = $region65
    $region64: #{simple_decoder_forward.1} parent=1 // pred_region
      %140 = sst [smem:[#allocation15]] [#allocation22]
      %141 = sst [smem:[#allocation16]] [#allocation21]
    $region65: #{simple_decoder_forward.1} parent=1 // pred_fallthru
      _
    %143 = shalt.err (0)
    %s145 = sshll.u32 %s136, 4
    %s146 = int_to_ptr.vmem [resolvable:$true] %s145
    %148 = dma.hbm_to_vmem [thread:$0]  %s135, 16, %s146, %s137
    %s149 = sld [smem:[#allocation4 + $0x4]]
    %s150 = smul.addr %s149, 16
    %s151 = scalar_lea.hbm %s1, %s150
    %s152 = scalar_lea.vmem [#allocation2], 4
    %s153 = scalar_lea.sflag [#allocation3], 4
    // Predicated region
    $region66: #{simple_decoder_forward.1} parent=1 // pred_check
      _
    $region67: #{simple_decoder_forward.1} parent=1 // pred_check_branch
      %155 = sbr.rel target = $region69
    $region68: #{simple_decoder_forward.1} parent=1 // pred_region
      %156 = sst [smem:[#allocation15]] [#allocation24]
      %157 = sst [smem:[#allocation16]] [#allocation23]
    $region69: #{simple_decoder_forward.1} parent=1 // pred_fallthru
      _
    %159 = shalt.err (0)
    %s161 = sshll.u32 %s152, 4
    %s162 = int_to_ptr.vmem [resolvable:$true] %s161
    %164 = dma.hbm_to_vmem [thread:$0]  %s151, 16, %s162, %s153
    %s165 = sld [smem:[#allocation4 + $0x5]]
    %s166 = smul.addr %s165, 16
    %s167 = scalar_lea.hbm %s1, %s166
    %s168 = scalar_lea.vmem [#allocation2], 5
    %s169 = scalar_lea.sflag [#allocation3], 5
    // Predicated region
    $region70: #{simple_decoder_forward.1} parent=1 // pred_check
      _
    $region71: #{simple_decoder_forward.1} parent=1 // pred_check_branch
      %171 = sbr.rel target = $region73
    $region72: #{simple_decoder_forward.1} parent=1 // pred_region
      %172 = sst [smem:[#allocation15]] [#allocation26]
      %173 = sst [smem:[#allocation16]] [#allocation25]
    $region73: #{simple_decoder_forward.1} parent=1 // pred_fallthru
      _
    %175 = shalt.err (0)
    %s177 = sshll.u32 %s168, 4
    %s178 = int_to_ptr.vmem [resolvable:$true] %s177
    %180 = dma.hbm_to_vmem [thread:$0]  %s167, 16, %s178, %s169
    %s181 = sld [smem:[#allocation4 + $0x6]]
    %s182 = smul.addr %s181, 16
    %s183 = scalar_lea.hbm %s1, %s182
    %s184 = scalar_lea.vmem [#allocation2], 6
    %s185 = scalar_lea.sflag [#allocation3], 6
    // Predicated region
    $region74: #{simple_decoder_forward.1} parent=1 // pred_check
      _
    $region75: #{simple_decoder_forward.1} parent=1 // pred_check_branch
      %187 = sbr.rel target = $region77
    $region76: #{simple_decoder_forward.1} parent=1 // pred_region
      %188 = sst [smem:[#allocation15]] [#allocation28]
      %189 = sst [smem:[#allocation16]] [#allocation27]
    $region77: #{simple_decoder_forward.1} parent=1 // pred_fallthru
      _
    %191 = shalt.err (0)
    %s193 = sshll.u32 %s184, 4
    %s194 = int_to_ptr.vmem [resolvable:$true] %s193
    %196 = dma.hbm_to_vmem [thread:$0]  %s183, 16, %s194, %s185
    %s197 = sld [smem:[#allocation4 + $0x7]]
    %s198 = smul.addr %s197, 16
    %s199 = scalar_lea.hbm %s1, %s198
    %s200 = scalar_lea.vmem [#allocation2], 7
    %s201 = scalar_lea.sflag [#allocation3], 7
    // Predicated region
    $region78: #{simple_decoder_forward.1} parent=1 // pred_check
      _
    $region79: #{simple_decoder_forward.1} parent=1 // pred_check_branch
      %203 = sbr.rel target = $region81
    $region80: #{simple_decoder_forward.1} parent=1 // pred_region
      %204 = sst [smem:[#allocation15]] [#allocation30]
      %205 = sst [smem:[#allocation16]] [#allocation29]
    $region81: #{simple_decoder_forward.1} parent=1 // pred_fallthru
      _
    %207 = shalt.err (0)
    %s209 = sshll.u32 %s200, 4
    %s210 = int_to_ptr.vmem [resolvable:$true] %s209
    %212 = dma.hbm_to_vmem [thread:$0]  %s199, 16, %s210, %s201
    %s213 = smul.u32 1, 1
    %s214 = sshll.u32 %s213, 4
    %215 = dma.done [#allocation3], %s214
    %s216 = sshll.u32 %s213, 4
    %217 = dma.done %s105, %s216
    %s218 = sshll.u32 %s213, 4
    %219 = dma.done %s121, %s218
    %s220 = sshll.u32 %s213, 4
    %221 = dma.done %s137, %s220
    %s222 = sshll.u32 %s213, 4
    %223 = dma.done %s153, %s222
    %s224 = sshll.u32 %s213, 4
    %225 = dma.done %s169, %s224
    %s226 = sshll.u32 %s213, 4
    %227 = dma.done %s185, %s226
    %s228 = sshll.u32 %s213, 4
    %229 = dma.done %s201, %s228
    %v230 = vld [vmem:[#allocation2] sm:$0xff]
    %v231 = vld [vmem:[%s8] sm:$0xff]
    %v232 = vld [vmem:[#allocation8] sm:$0xff]
    %v233 = vld [vmem:[#allocation8 + $0x8] sm:$0xff]
    %v234 = vld [vmem:[#allocation8 + $0x10] sm:$0xff]
    %v235 = vld [vmem:[#allocation8 + $0x18] sm:$0xff]
    %v236 = vld [vmem:[#allocation8 + $0x20] sm:$0xff]
    %v237 = vld [vmem:[#allocation8 + $0x28] sm:$0xff]
    %v238 = vld [vmem:[#allocation8 + $0x30] sm:$0xff]
    %v239 = vld [vmem:[#allocation8 + $0x38] sm:$0xff]
    %v240 = vld [vmem:[#allocation8 + $0x40] sm:$0xff]
    %v241 = vld [vmem:[#allocation8 + $0x48] sm:$0xff]
    %v242 = vld [vmem:[#allocation8 + $0x50] sm:$0xff]
    %v243 = vld [vmem:[#allocation8 + $0x58] sm:$0xff]
    %v244 = vld [vmem:[#allocation8 + $0x60] sm:$0xff]
    %v245 = vld [vmem:[#allocation8 + $0x68] sm:$0xff]
    %v246 = vld [vmem:[#allocation8 + $0x70] sm:$0xff]
    %v247 = vld [vmem:[#allocation8 + $0x78] sm:$0xff]
    %v248 = vld [vmem:[#allocation8 + $0x80] sm:$0xff]
    %v249 = vld [vmem:[#allocation8 + $0x88] sm:$0xff]
    %v250 = vld [vmem:[#allocation8 + $0x90] sm:$0xff]
    %v251 = vld [vmem:[#allocation8 + $0x98] sm:$0xff]
    %v252 = vld [vmem:[#allocation8 + $0xa0] sm:$0xff]
    %v253 = vld [vmem:[#allocation8 + $0xa8] sm:$0xff]
    %v254 = vld [vmem:[#allocation8 + $0xb0] sm:$0xff]
    %v255 = vld [vmem:[#allocation8 + $0xb8] sm:$0xff]
    %v256 = vld [vmem:[#allocation8 + $0xc0] sm:$0xff]
    %v257 = vld [vmem:[#allocation8 + $0xc8] sm:$0xff]
    %v258 = vld [vmem:[#allocation8 + $0xd0] sm:$0xff]
    %v259 = vld [vmem:[#allocation8 + $0xd8] sm:$0xff]
    %v260 = vld [vmem:[#allocation8 + $0xe0] sm:$0xff]
    %v261 = vld [vmem:[#allocation8 + $0xe8] sm:$0xff]
    %v262 = vld [vmem:[#allocation8 + $0xf0] sm:$0xff]
    %v263 = vld [vmem:[#allocation8 + $0xf8] sm:$0xff]
    %v264 = vld [vmem:[#allocation8 + $0x100] sm:$0xff]
    %v265 = vld [vmem:[#allocation8 + $0x108] sm:$0xff]
    %v266 = vld [vmem:[#allocation8 + $0x110] sm:$0xff]
    %v267 = vld [vmem:[#allocation8 + $0x118] sm:$0xff]
    %v268 = vld [vmem:[#allocation8 + $0x120] sm:$0xff]
    %v269 = vld [vmem:[#allocation8 + $0x128] sm:$0xff]
    %v270 = vld [vmem:[#allocation8 + $0x130] sm:$0xff]
    %v271 = vld [vmem:[#allocation8 + $0x138] sm:$0xff]
    %v272 = vld [vmem:[#allocation8 + $0x140] sm:$0xff]
    %v273 = vld [vmem:[#allocation8 + $0x148] sm:$0xff]
    %v274 = vld [vmem:[#allocation8 + $0x150] sm:$0xff]
    %v275 = vld [vmem:[#allocation8 + $0x158] sm:$0xff]
    %v276 = vld [vmem:[#allocation8 + $0x160] sm:$0xff]
    %v277 = vld [vmem:[#allocation8 + $0x168] sm:$0xff]
    %v278 = vld [vmem:[#allocation8 + $0x170] sm:$0xff]
    %v279 = vld [vmem:[#allocation8 + $0x178] sm:$0xff]
    %v280 = vld [vmem:[%s4] sm:$0x7]
    %v282 = vlaneseq
    %v283 = vshrl.u32 %v282, 7
    %v284 = vsub.s32 0, %v283
    %v285 = vrot.slane %v280, %v284
    %v286 = vlaneseq
    %v287 = vshrl.u32 %v286, 7
    %v288 = vsub.s32 1, %v287
    %v289 = vrot.slane %v280, %v288
    %v290 = vlaneseq
    %v291 = vshrl.u32 %v290, 7
    %v292 = vsub.s32 2, %v291
    %v293 = vrot.slane %v280, %v292
    %297 = vmatprep.subr.mxu0 %v233
    %298 = vmatpush1.msra.mxu0 %v232
    %299 = vmatprep.subr.mxu0 %v236
    %300 = vmatpush1.msra.mxu0 %v235
    %301 = vmatprep.subr.mxu0 %v239
    %302 = vmatpush1.msra.mxu0 %v238
    %303 = vmatprep.subr.mxu0 %v242
    %304 = vmatpush1.msra.mxu0 %v241
    %305 = vmatprep.subr.mxu0 %v245
    %306 = vmatpush1.msra.mxu0 %v244
    %307 = vmatprep.subr.mxu0 %v248
    %308 = vmatpush1.msra.mxu0 %v247
    %309 = vmatprep.subr.mxu0 %v251
    %310 = vmatpush1.msra.mxu0 %v250
    %311 = vmatprep.subr.mxu0 %v254
    %312 = vmatpush1.msra.mxu0 %v253
    %313 = vmatprep.subr.mxu0 %v257
    %314 = vmatpush1.msra.mxu0 %v256
    %315 = vmatprep.subr.mxu0 %v260
    %316 = vmatpush1.msra.mxu0 %v259
    %317 = vmatprep.subr.mxu0 %v263
    %318 = vmatpush1.msra.mxu0 %v262
    %319 = vmatprep.subr.mxu0 %v266
    %320 = vmatpush1.msra.mxu0 %v265
    %321 = vmatprep.subr.mxu0 %v269
    %322 = vmatpush1.msra.mxu0 %v268
    %323 = vmatprep.subr.mxu0 %v272
    %324 = vmatpush1.msra.mxu0 %v271
    %325 = vmatprep.subr.mxu0 %v275
    %326 = vmatpush1.msra.mxu0 %v274
    %327 = vmatprep.subr.mxu0 %v278
    %328 = vmatpush1.msra.mxu0 %v277
    %329 = vmatprep.subr.mxu0 0.0
    %330 = vmatpush1.msra.mxu0 0.0
    %331 = vmatprep.subr.mxu0 0.0
    %332 = vmatpush1.msra.mxu0 0.0
    %333 = vmatprep.subr.mxu0 0.0
    %334 = vmatpush1.msra.mxu0 0.0
    %335 = vmatprep.subr.mxu0 0.0
    %336 = vmatpush1.msra.mxu0 0.0
    %337 = vmatprep.subr.mxu0 0.0
    %338 = vmatpush1.msra.mxu0 0.0
    %339 = vmatprep.subr.mxu0 0.0
    %340 = vmatpush1.msra.mxu0 0.0
    %341 = vmatprep.subr.mxu0 0.0
    %342 = vmatpush1.msra.mxu0 0.0
    %343 = vmatprep.subr.mxu0 0.0
    %344 = vmatpush1.msra.mxu0 0.0
    %345 = vmatprep.subr.mxu0 0.0
    %346 = vmatpush1.msra.mxu0 0.0
    %347 = vmatprep.subr.mxu0 0.0
    %348 = vmatpush1.msra.mxu0 0.0
    %349 = vmatprep.subr.mxu0 0.0
    %350 = vmatpush1.msra.mxu0 0.0
    %351 = vmatprep.subr.mxu0 0.0
    %352 = vmatpush1.msra.mxu0 0.0
    %353 = vmatprep.subr.mxu0 0.0
    %354 = vmatpush1.msra.mxu0 0.0
    %355 = vmatprep.subr.mxu0 0.0
    %356 = vmatpush1.msra.mxu0 0.0
    %357 = vmatprep.subr.mxu0 0.0
    %358 = vmatpush1.msra.mxu0 0.0
    %359 = vmatprep.subr.mxu0 0.0
    %360 = vmatpush1.msra.mxu0 0.0
    %361 = vmatprep.mubr.f32.mxu0 0.0
    %362 = vmatmul.mubr.f32.gmra.mrb[0].mxu0 %v230
    %v363 = vpop.f32.mrb[0].mxu0
    %v364 = vadd.f32 %v285, %v363
    %v365 = vpop.f32.mrb[0].mxu0
    %v366 = vadd.f32 %v289, %v365
    %367 = vdwg.mxu0
    %368 = vmatprep.subr.mxu0 0.0
    %369 = vmatpush1.msra.mxu0 %v234
    %370 = vmatprep.subr.mxu0 0.0
    %371 = vmatpush1.msra.mxu0 %v237
    %372 = vmatprep.subr.mxu0 0.0
    %373 = vmatpush1.msra.mxu0 %v240
    %374 = vmatprep.subr.mxu0 0.0
    %375 = vmatpush1.msra.mxu0 %v243
    %376 = vmatprep.subr.mxu0 0.0
    %377 = vmatpush1.msra.mxu0 %v246
    %378 = vmatprep.subr.mxu0 0.0
    %379 = vmatpush1.msra.mxu0 %v249
    %380 = vmatprep.subr.mxu0 0.0
    %381 = vmatpush1.msra.mxu0 %v252
    %382 = vmatprep.subr.mxu0 0.0
    %383 = vmatpush1.msra.mxu0 %v255
    %384 = vmatprep.subr.mxu0 0.0
    %385 = vmatpush1.msra.mxu0 %v258
    %386 = vmatprep.subr.mxu0 0.0
    %387 = vmatpush1.msra.mxu0 %v261
    %388 = vmatprep.subr.mxu0 0.0
    %389 = vmatpush1.msra.mxu0 %v264
    %390 = vmatprep.subr.mxu0 0.0
    %391 = vmatpush1.msra.mxu0 %v267
    %392 = vmatprep.subr.mxu0 0.0
    %393 = vmatpush1.msra.mxu0 %v270
    %394 = vmatprep.subr.mxu0 0.0
    %395 = vmatpush1.msra.mxu0 %v273
    %396 = vmatprep.subr.mxu0 0.0
    %397 = vmatpush1.msra.mxu0 %v276
    %398 = vmatprep.subr.mxu0 0.0
    %399 = vmatpush1.msra.mxu0 %v279
    %400 = vmatprep.subr.mxu0 0.0
    %401 = vmatpush1.msra.mxu0 0.0
    %402 = vmatprep.subr.mxu0 0.0
    %403 = vmatpush1.msra.mxu0 0.0
    %404 = vmatprep.subr.mxu0 0.0
    %405 = vmatpush1.msra.mxu0 0.0
    %406 = vmatprep.subr.mxu0 0.0
    %407 = vmatpush1.msra.mxu0 0.0
    %408 = vmatprep.subr.mxu0 0.0
    %409 = vmatpush1.msra.mxu0 0.0
    %410 = vmatprep.subr.mxu0 0.0
    %411 = vmatpush1.msra.mxu0 0.0
    %412 = vmatprep.subr.mxu0 0.0
    %413 = vmatpush1.msra.mxu0 0.0
    %414 = vmatprep.subr.mxu0 0.0
    %415 = vmatpush1.msra.mxu0 0.0
    %416 = vmatprep.subr.mxu0 0.0
    %417 = vmatpush1.msra.mxu0 0.0
    %418 = vmatprep.subr.mxu0 0.0
    %419 = vmatpush1.msra.mxu0 0.0
    %420 = vmatprep.subr.mxu0 0.0
    %421 = vmatpush1.msra.mxu0 0.0
    %422 = vmatprep.subr.mxu0 0.0
    %423 = vmatpush1.msra.mxu0 0.0
    %424 = vmatprep.subr.mxu0 0.0
    %425 = vmatpush1.msra.mxu0 0.0
    %426 = vmatprep.subr.mxu0 0.0
    %427 = vmatpush1.msra.mxu0 0.0
    %428 = vmatprep.subr.mxu0 0.0
    %429 = vmatpush1.msra.mxu0 0.0
    %430 = vmatprep.subr.mxu0 0.0
    %431 = vmatpush1.msra.mxu0 0.0
    %432 = vmatprep.mubr.f32.mxu0 0.0
    %433 = vmatmul.mubr.f32.gmra.mrb[0].mxu0 %v230
    %v434 = vpop.f32.mrb[0].mxu0
    %v435 = vadd.f32 %v293, %v434
    %v436 = vpop.f32.mrb[0].mxu0
    %437 = vdwg.mxu0
    %v438 = vld [vmem:[#allocation9] sm:$0xff]
    %v439 = vld [vmem:[#allocation9 + $0x8] sm:$0xff]
    %v440 = vld [vmem:[#allocation9 + $0x10] sm:$0xff]
    %v441 = vld [vmem:[#allocation9 + $0x18] sm:$0xff]
    %v442 = vld [vmem:[#allocation9 + $0x20] sm:$0xff]
    %v443 = vld [vmem:[#allocation9 + $0x28] sm:$0xff]
    %v444 = vld [vmem:[#allocation9 + $0x30] sm:$0xff]
    %v445 = vld [vmem:[#allocation9 + $0x38] sm:$0xff]
    %v446 = vld [vmem:[#allocation9 + $0x40] sm:$0xff]
    %v447 = vld [vmem:[#allocation9 + $0x48] sm:$0xff]
    %v448 = vld [vmem:[#allocation9 + $0x50] sm:$0xff]
    %v449 = vld [vmem:[#allocation9 + $0x58] sm:$0xff]
    %v450 = vld [vmem:[#allocation9 + $0x60] sm:$0xff]
    %v451 = vld [vmem:[#allocation9 + $0x68] sm:$0xff]
    %v452 = vld [vmem:[#allocation9 + $0x70] sm:$0xff]
    %v453 = vld [vmem:[#allocation9 + $0x78] sm:$0xff]
    %v454 = vld [vmem:[#allocation9 + $0x80] sm:$0xff]
    %v455 = vld [vmem:[#allocation9 + $0x88] sm:$0xff]
    %v456 = vld [vmem:[#allocation9 + $0x90] sm:$0xff]
    %v457 = vld [vmem:[#allocation9 + $0x98] sm:$0xff]
    %v458 = vld [vmem:[#allocation9 + $0xa0] sm:$0xff]
    %v459 = vld [vmem:[#allocation9 + $0xa8] sm:$0xff]
    %v460 = vld [vmem:[#allocation9 + $0xb0] sm:$0xff]
    %v461 = vld [vmem:[#allocation9 + $0xb8] sm:$0xff]
    %v462 = vld [vmem:[#allocation9 + $0xc0] sm:$0xff]
    %v463 = vld [vmem:[#allocation9 + $0xc8] sm:$0xff]
    %v464 = vld [vmem:[#allocation9 + $0xd0] sm:$0xff]
    %v465 = vld [vmem:[#allocation9 + $0xd8] sm:$0xff]
    %v466 = vld [vmem:[#allocation9 + $0xe0] sm:$0xff]
    %v467 = vld [vmem:[#allocation9 + $0xe8] sm:$0xff]
    %v468 = vld [vmem:[#allocation9 + $0xf0] sm:$0xff]
    %v469 = vld [vmem:[#allocation9 + $0xf8] sm:$0xff]
    %v470 = vld [vmem:[#allocation9 + $0x100] sm:$0xff]
    %v471 = vld [vmem:[#allocation9 + $0x108] sm:$0xff]
    %v472 = vld [vmem:[#allocation9 + $0x110] sm:$0xff]
    %v473 = vld [vmem:[#allocation9 + $0x118] sm:$0xff]
    %v474 = vld [vmem:[#allocation9 + $0x120] sm:$0xff]
    %v475 = vld [vmem:[#allocation9 + $0x128] sm:$0xff]
    %v476 = vld [vmem:[#allocation9 + $0x130] sm:$0xff]
    %v477 = vld [vmem:[#allocation9 + $0x138] sm:$0xff]
    %v478 = vld [vmem:[#allocation9 + $0x140] sm:$0xff]
    %v479 = vld [vmem:[#allocation9 + $0x148] sm:$0xff]
    %v480 = vld [vmem:[#allocation9 + $0x150] sm:$0xff]
    %v481 = vld [vmem:[#allocation9 + $0x158] sm:$0xff]
    %v482 = vld [vmem:[#allocation9 + $0x160] sm:$0xff]
    %v483 = vld [vmem:[#allocation9 + $0x168] sm:$0xff]
    %v484 = vld [vmem:[#allocation9 + $0x170] sm:$0xff]
    %v485 = vld [vmem:[#allocation9 + $0x178] sm:$0xff]
    %v486 = vld [vmem:[%s5] sm:$0x7]
    %v488 = vlaneseq
    %v489 = vshrl.u32 %v488, 7
    %v490 = vsub.s32 0, %v489
    %v491 = vrot.slane %v486, %v490
    %v492 = vlaneseq
    %v493 = vshrl.u32 %v492, 7
    %v494 = vsub.s32 1, %v493
    %v495 = vrot.slane %v486, %v494
    %v496 = vlaneseq
    %v497 = vshrl.u32 %v496, 7
    %v498 = vsub.s32 2, %v497
    %v499 = vrot.slane %v486, %v498
    %503 = vmatprep.subr.mxu0 %v439
    %504 = vmatpush1.msra.mxu0 %v438
    %505 = vmatprep.subr.mxu0 %v442
    %506 = vmatpush1.msra.mxu0 %v441
    %507 = vmatprep.subr.mxu0 %v445
    %508 = vmatpush1.msra.mxu0 %v444
    %509 = vmatprep.subr.mxu0 %v448
    %510 = vmatpush1.msra.mxu0 %v447
    %511 = vmatprep.subr.mxu0 %v451
    %512 = vmatpush1.msra.mxu0 %v450
    %513 = vmatprep.subr.mxu0 %v454
    %514 = vmatpush1.msra.mxu0 %v453
    %515 = vmatprep.subr.mxu0 %v457
    %516 = vmatpush1.msra.mxu0 %v456
    %517 = vmatprep.subr.mxu0 %v460
    %518 = vmatpush1.msra.mxu0 %v459
    %519 = vmatprep.subr.mxu0 %v463
    %520 = vmatpush1.msra.mxu0 %v462
    %521 = vmatprep.subr.mxu0 %v466
    %522 = vmatpush1.msra.mxu0 %v465
    %523 = vmatprep.subr.mxu0 %v469
    %524 = vmatpush1.msra.mxu0 %v468
    %525 = vmatprep.subr.mxu0 %v472
    %526 = vmatpush1.msra.mxu0 %v471
    %527 = vmatprep.subr.mxu0 %v475
    %528 = vmatpush1.msra.mxu0 %v474
    %529 = vmatprep.subr.mxu0 %v478
    %530 = vmatpush1.msra.mxu0 %v477
    %531 = vmatprep.subr.mxu0 %v481
    %532 = vmatpush1.msra.mxu0 %v480
    %533 = vmatprep.subr.mxu0 %v484
    %534 = vmatpush1.msra.mxu0 %v483
    %535 = vmatprep.subr.mxu0 0.0
    %536 = vmatpush1.msra.mxu0 0.0
    %537 = vmatprep.subr.mxu0 0.0
    %538 = vmatpush1.msra.mxu0 0.0
    %539 = vmatprep.subr.mxu0 0.0
    %540 = vmatpush1.msra.mxu0 0.0
    %541 = vmatprep.subr.mxu0 0.0
    %542 = vmatpush1.msra.mxu0 0.0
    %543 = vmatprep.subr.mxu0 0.0
    %544 = vmatpush1.msra.mxu0 0.0
    %545 = vmatprep.subr.mxu0 0.0
    %546 = vmatpush1.msra.mxu0 0.0
    %547 = vmatprep.subr.mxu0 0.0
    %548 = vmatpush1.msra.mxu0 0.0
    %549 = vmatprep.subr.mxu0 0.0
    %550 = vmatpush1.msra.mxu0 0.0
    %551 = vmatprep.subr.mxu0 0.0
    %552 = vmatpush1.msra.mxu0 0.0
    %553 = vmatprep.subr.mxu0 0.0
    %554 = vmatpush1.msra.mxu0 0.0
    %555 = vmatprep.subr.mxu0 0.0
    %556 = vmatpush1.msra.mxu0 0.0
    %557 = vmatprep.subr.mxu0 0.0
    %558 = vmatpush1.msra.mxu0 0.0
    %559 = vmatprep.subr.mxu0 0.0
    %560 = vmatpush1.msra.mxu0 0.0
    %561 = vmatprep.subr.mxu0 0.0
    %562 = vmatpush1.msra.mxu0 0.0
    %563 = vmatprep.subr.mxu0 0.0
    %564 = vmatpush1.msra.mxu0 0.0
    %565 = vmatprep.subr.mxu0 0.0
    %566 = vmatpush1.msra.mxu0 0.0
    %567 = vmatprep.mubr.f32.mxu0 0.0
    %568 = vmatmul.mubr.f32.gmra.mrb[0].mxu0 %v231
    %v569 = vpop.f32.mrb[0].mxu0
    %v570 = vadd.f32 %v491, %v569
    %v571 = vpop.f32.mrb[0].mxu0
    %v572 = vadd.f32 %v495, %v571
    %573 = vdwg.mxu0
    %574 = vmatprep.subr.mxu0 0.0
    %575 = vmatpush1.msra.mxu0 %v440
    %576 = vmatprep.subr.mxu0 0.0
    %577 = vmatpush1.msra.mxu0 %v443
    %578 = vmatprep.subr.mxu0 0.0
    %579 = vmatpush1.msra.mxu0 %v446
    %580 = vmatprep.subr.mxu0 0.0
    %581 = vmatpush1.msra.mxu0 %v449
    %582 = vmatprep.subr.mxu0 0.0
    %583 = vmatpush1.msra.mxu0 %v452
    %584 = vmatprep.subr.mxu0 0.0
    %585 = vmatpush1.msra.mxu0 %v455
    %586 = vmatprep.subr.mxu0 0.0
    %587 = vmatpush1.msra.mxu0 %v458
    %588 = vmatprep.subr.mxu0 0.0
    %589 = vmatpush1.msra.mxu0 %v461
    %590 = vmatprep.subr.mxu0 0.0
    %591 = vmatpush1.msra.mxu0 %v464
    %592 = vmatprep.subr.mxu0 0.0
    %593 = vmatpush1.msra.mxu0 %v467
    %594 = vmatprep.subr.mxu0 0.0
    %595 = vmatpush1.msra.mxu0 %v470
    %596 = vmatprep.subr.mxu0 0.0
    %597 = vmatpush1.msra.mxu0 %v473
    %598 = vmatprep.subr.mxu0 0.0
    %599 = vmatpush1.msra.mxu0 %v476
    %600 = vmatprep.subr.mxu0 0.0
    %601 = vmatpush1.msra.mxu0 %v479
    %602 = vmatprep.subr.mxu0 0.0
    %603 = vmatpush1.msra.mxu0 %v482
    %604 = vmatprep.subr.mxu0 0.0
    %605 = vmatpush1.msra.mxu0 %v485
    %606 = vmatprep.subr.mxu0 0.0
    %607 = vmatpush1.msra.mxu0 0.0
    %608 = vmatprep.subr.mxu0 0.0
    %609 = vmatpush1.msra.mxu0 0.0
    %610 = vmatprep.subr.mxu0 0.0
    %611 = vmatpush1.msra.mxu0 0.0
    %612 = vmatprep.subr.mxu0 0.0
    %613 = vmatpush1.msra.mxu0 0.0
    %614 = vmatprep.subr.mxu0 0.0
    %615 = vmatpush1.msra.mxu0 0.0
    %616 = vmatprep.subr.mxu0 0.0
    %617 = vmatpush1.msra.mxu0 0.0
    %618 = vmatprep.subr.mxu0 0.0
    %619 = vmatpush1.msra.mxu0 0.0
    %620 = vmatprep.subr.mxu0 0.0
    %621 = vmatpush1.msra.mxu0 0.0
    %622 = vmatprep.subr.mxu0 0.0
    %623 = vmatpush1.msra.mxu0 0.0
    %624 = vmatprep.subr.mxu0 0.0
    %625 = vmatpush1.msra.mxu0 0.0
    %626 = vmatprep.subr.mxu0 0.0
    %627 = vmatpush1.msra.mxu0 0.0
    %628 = vmatprep.subr.mxu0 0.0
    %629 = vmatpush1.msra.mxu0 0.0
    %630 = vmatprep.subr.mxu0 0.0
    %631 = vmatpush1.msra.mxu0 0.0
    %632 = vmatprep.subr.mxu0 0.0
    %633 = vmatpush1.msra.mxu0 0.0
    %634 = vmatprep.subr.mxu0 0.0
    %635 = vmatpush1.msra.mxu0 0.0
    %636 = vmatprep.subr.mxu0 0.0
    %637 = vmatpush1.msra.mxu0 0.0
    %638 = vmatprep.mubr.f32.mxu0 0.0
    %639 = vmatmul.mubr.f32.gmra.mrb[0].mxu0 %v231
    %v640 = vpop.f32.mrb[0].mxu0
    %v641 = vadd.f32 %v499, %v640
    %v642 = vpop.f32.mrb[0].mxu0
    %643 = vdwg.mxu0
    %v644 = vadd.f32 %v364, %v570
    %v645 = vxor.u32 %v644, 2147483648
    %v646 = vmul.f32 %v645, 1.442695
    %v647 = vpow.pop %v646
    %v648 = vadd.f32 %v647, 1.0
    %v649 = vrcp.pop %v648
    %v650 = vmul.f32 1.0, %v649
    %v651 = vadd.f32 %v366, %v572
    %v652 = vxor.u32 %v651, 2147483648
    %v653 = vmul.f32 %v652, 1.442695
    %v654 = vpow.pop %v653
    %v655 = vadd.f32 %v654, 1.0
    %v656 = vrcp.pop %v655
    %v657 = vmul.f32 1.0, %v656
    %v658 = vmul.f32 %v650, %v641
    %v659 = vadd.f32 %v435, %v658
    %v660 = vtanh.pop %v659
    %v661 = vsub.f32 1.0, %v657
    %v662 = vmul.f32 %v661, %v660
    %v663 = vmul.f32 %v657, %v231
    %v664 = vadd.f32 %v662, %v663
    %665 = vst [vmem:[%s9] sm:$0xff] %v664
    %s666 = scalar_lea.vmem %s8, 8
    %v667 = vld [vmem:[%s666] sm:$0xff]
    %s668 = scalar_lea.vmem [#allocation8], 384
    %v669 = vld [vmem:[%s668] sm:$0xff]
    %v670 = vld [vmem:[%s668 + $0x8] sm:$0xff]
    %v671 = vld [vmem:[%s668 + $0x10] sm:$0xff]
    %v672 = vld [vmem:[%s668 + $0x18] sm:$0xff]
    %v673 = vld [vmem:[%s668 + $0x20] sm:$0xff]
    %v674 = vld [vmem:[%s668 + $0x28] sm:$0xff]
    %v675 = vld [vmem:[%s668 + $0x30] sm:$0xff]
    %v676 = vld [vmem:[%s668 + $0x38] sm:$0xff]
    %v677 = vld [vmem:[%s668 + $0x40] sm:$0xff]
    %v678 = vld [vmem:[%s668 + $0x48] sm:$0xff]
    %v679 = vld [vmem:[%s668 + $0x50] sm:$0xff]
    %v680 = vld [vmem:[%s668 + $0x58] sm:$0xff]
    %v681 = vld [vmem:[%s668 + $0x60] sm:$0xff]
    %v682 = vld [vmem:[%s668 + $0x68] sm:$0xff]
    %v683 = vld [vmem:[%s668 + $0x70] sm:$0xff]
    %v684 = vld [vmem:[%s668 + $0x78] sm:$0xff]
    %v685 = vld [vmem:[%s668 + $0x80] sm:$0xff]
    %v686 = vld [vmem:[%s668 + $0x88] sm:$0xff]
    %v687 = vld [vmem:[%s668 + $0x90] sm:$0xff]
    %v688 = vld [vmem:[%s668 + $0x98] sm:$0xff]
    %v689 = vld [vmem:[%s668 + $0xa0] sm:$0xff]
    %v690 = vld [vmem:[%s668 + $0xa8] sm:$0xff]
    %v691 = vld [vmem:[%s668 + $0xb0] sm:$0xff]
    %v692 = vld [vmem:[%s668 + $0xb8] sm:$0xff]
    %v693 = vld [vmem:[%s668 + $0xc0] sm:$0xff]
    %v694 = vld [vmem:[%s668 + $0xc8] sm:$0xff]
    %v695 = vld [vmem:[%s668 + $0xd0] sm:$0xff]
    %v696 = vld [vmem:[%s668 + $0xd8] sm:$0xff]
    %v697 = vld [vmem:[%s668 + $0xe0] sm:$0xff]
    %v698 = vld [vmem:[%s668 + $0xe8] sm:$0xff]
    %v699 = vld [vmem:[%s668 + $0xf0] sm:$0xff]
    %v700 = vld [vmem:[%s668 + $0xf8] sm:$0xff]
    %v701 = vld [vmem:[%s668 + $0x100] sm:$0xff]
    %v702 = vld [vmem:[%s668 + $0x108] sm:$0xff]
    %v703 = vld [vmem:[%s668 + $0x110] sm:$0xff]
    %v704 = vld [vmem:[%s668 + $0x118] sm:$0xff]
    %v705 = vld [vmem:[%s668 + $0x120] sm:$0xff]
    %v706 = vld [vmem:[%s668 + $0x128] sm:$0xff]
    %v707 = vld [vmem:[%s668 + $0x130] sm:$0xff]
    %v708 = vld [vmem:[%s668 + $0x138] sm:$0xff]
    %v709 = vld [vmem:[%s668 + $0x140] sm:$0xff]
    %v710 = vld [vmem:[%s668 + $0x148] sm:$0xff]
    %v711 = vld [vmem:[%s668 + $0x150] sm:$0xff]
    %v712 = vld [vmem:[%s668 + $0x158] sm:$0xff]
    %v713 = vld [vmem:[%s668 + $0x160] sm:$0xff]
    %v714 = vld [vmem:[%s668 + $0x168] sm:$0xff]
    %v715 = vld [vmem:[%s668 + $0x170] sm:$0xff]
    %v716 = vld [vmem:[%s668 + $0x178] sm:$0xff]
    %s717 = scalar_lea.vmem %s4, 3
    %v718 = vld [vmem:[%s717] sm:$0x7]
    %v720 = vlaneseq
    %v721 = vshrl.u32 %v720, 7
    %v722 = vsub.s32 0, %v721
    %v723 = vrot.slane %v718, %v722
    %v724 = vlaneseq
    %v725 = vshrl.u32 %v724, 7
    %v726 = vsub.s32 1, %v725
    %v727 = vrot.slane %v718, %v726
    %v728 = vlaneseq
    %v729 = vshrl.u32 %v728, 7
    %v730 = vsub.s32 2, %v729
    %v731 = vrot.slane %v718, %v730
    %735 = vmatprep.subr.mxu0 %v670
    %736 = vmatpush1.msra.mxu0 %v669
    %737 = vmatprep.subr.mxu0 %v673
    %738 = vmatpush1.msra.mxu0 %v672
    %739 = vmatprep.subr.mxu0 %v676
    %740 = vmatpush1.msra.mxu0 %v675
    %741 = vmatprep.subr.mxu0 %v679
    %742 = vmatpush1.msra.mxu0 %v678
    %743 = vmatprep.subr.mxu0 %v682
    %744 = vmatpush1.msra.mxu0 %v681
    %745 = vmatprep.subr.mxu0 %v685
    %746 = vmatpush1.msra.mxu0 %v684
    %747 = vmatprep.subr.mxu0 %v688
    %748 = vmatpush1.msra.mxu0 %v687
    %749 = vmatprep.subr.mxu0 %v691
    %750 = vmatpush1.msra.mxu0 %v690
    %751 = vmatprep.subr.mxu0 %v694
    %752 = vmatpush1.msra.mxu0 %v693
    %753 = vmatprep.subr.mxu0 %v697
    %754 = vmatpush1.msra.mxu0 %v696
    %755 = vmatprep.subr.mxu0 %v700
    %756 = vmatpush1.msra.mxu0 %v699
    %757 = vmatprep.subr.mxu0 %v703
    %758 = vmatpush1.msra.mxu0 %v702
    %759 = vmatprep.subr.mxu0 %v706
    %760 = vmatpush1.msra.mxu0 %v705
    %761 = vmatprep.subr.mxu0 %v709
    %762 = vmatpush1.msra.mxu0 %v708
    %763 = vmatprep.subr.mxu0 %v712
    %764 = vmatpush1.msra.mxu0 %v711
    %765 = vmatprep.subr.mxu0 %v715
    %766 = vmatpush1.msra.mxu0 %v714
    %767 = vmatprep.subr.mxu0 0.0
    %768 = vmatpush1.msra.mxu0 0.0
    %769 = vmatprep.subr.mxu0 0.0
    %770 = vmatpush1.msra.mxu0 0.0
    %771 = vmatprep.subr.mxu0 0.0
    %772 = vmatpush1.msra.mxu0 0.0
    %773 = vmatprep.subr.mxu0 0.0
    %774 = vmatpush1.msra.mxu0 0.0
    %775 = vmatprep.subr.mxu0 0.0
    %776 = vmatpush1.msra.mxu0 0.0
    %777 = vmatprep.subr.mxu0 0.0
    %778 = vmatpush1.msra.mxu0 0.0
    %779 = vmatprep.subr.mxu0 0.0
    %780 = vmatpush1.msra.mxu0 0.0
    %781 = vmatprep.subr.mxu0 0.0
    %782 = vmatpush1.msra.mxu0 0.0
    %783 = vmatprep.subr.mxu0 0.0
    %784 = vmatpush1.msra.mxu0 0.0
    %785 = vmatprep.subr.mxu0 0.0
    %786 = vmatpush1.msra.mxu0 0.0
    %787 = vmatprep.subr.mxu0 0.0
    %788 = vmatpush1.msra.mxu0 0.0
    %789 = vmatprep.subr.mxu0 0.0
    %790 = vmatpush1.msra.mxu0 0.0
    %791 = vmatprep.subr.mxu0 0.0
    %792 = vmatpush1.msra.mxu0 0.0
    %793 = vmatprep.subr.mxu0 0.0
    %794 = vmatpush1.msra.mxu0 0.0
    %795 = vmatprep.subr.mxu0 0.0
    %796 = vmatpush1.msra.mxu0 0.0
    %797 = vmatprep.subr.mxu0 0.0
    %798 = vmatpush1.msra.mxu0 0.0
    %799 = vmatprep.mubr.f32.mxu0 0.0
    %800 = vmatmul.mubr.f32.gmra.mrb[0].mxu0 %v664
    %v801 = vpop.f32.mrb[0].mxu0
    %v802 = vadd.f32 %v723, %v801
    %v803 = vpop.f32.mrb[0].mxu0
    %v804 = vadd.f32 %v727, %v803
    %805 = vdwg.mxu0
    %806 = vmatprep.subr.mxu0 0.0
    %807 = vmatpush1.msra.mxu0 %v671
    %808 = vmatprep.subr.mxu0 0.0
    %809 = vmatpush1.msra.mxu0 %v674
    %810 = vmatprep.subr.mxu0 0.0
    %811 = vmatpush1.msra.mxu0 %v677
    %812 = vmatprep.subr.mxu0 0.0
    %813 = vmatpush1.msra.mxu0 %v680
    %814 = vmatprep.subr.mxu0 0.0
    %815 = vmatpush1.msra.mxu0 %v683
    %816 = vmatprep.subr.mxu0 0.0
    %817 = vmatpush1.msra.mxu0 %v686
    %818 = vmatprep.subr.mxu0 0.0
    %819 = vmatpush1.msra.mxu0 %v689
    %820 = vmatprep.subr.mxu0 0.0
    %821 = vmatpush1.msra.mxu0 %v692
    %822 = vmatprep.subr.mxu0 0.0
    %823 = vmatpush1.msra.mxu0 %v695
    %824 = vmatprep.subr.mxu0 0.0
    %825 = vmatpush1.msra.mxu0 %v698
    %826 = vmatprep.subr.mxu0 0.0
    %827 = vmatpush1.msra.mxu0 %v701
    %828 = vmatprep.subr.mxu0 0.0
    %829 = vmatpush1.msra.mxu0 %v704
    %830 = vmatprep.subr.mxu0 0.0
    %831 = vmatpush1.msra.mxu0 %v707
    %832 = vmatprep.subr.mxu0 0.0
    %833 = vmatpush1.msra.mxu0 %v710
    %834 = vmatprep.subr.mxu0 0.0
    %835 = vmatpush1.msra.mxu0 %v713
    %836 = vmatprep.subr.mxu0 0.0
    %837 = vmatpush1.msra.mxu0 %v716
    %838 = vmatprep.subr.mxu0 0.0
    %839 = vmatpush1.msra.mxu0 0.0
    %840 = vmatprep.subr.mxu0 0.0
    %841 = vmatpush1.msra.mxu0 0.0
    %842 = vmatprep.subr.mxu0 0.0
    %843 = vmatpush1.msra.mxu0 0.0
    %844 = vmatprep.subr.mxu0 0.0
    %845 = vmatpush1.msra.mxu0 0.0
    %846 = vmatprep.subr.mxu0 0.0
    %847 = vmatpush1.msra.mxu0 0.0
    %848 = vmatprep.subr.mxu0 0.0
    %849 = vmatpush1.msra.mxu0 0.0
    %850 = vmatprep.subr.mxu0 0.0
    %851 = vmatpush1.msra.mxu0 0.0
    %852 = vmatprep.subr.mxu0 0.0
    %853 = vmatpush1.msra.mxu0 0.0
    %854 = vmatprep.subr.mxu0 0.0
    %855 = vmatpush1.msra.mxu0 0.0
    %856 = vmatprep.subr.mxu0 0.0
    %857 = vmatpush1.msra.mxu0 0.0
    %858 = vmatprep.subr.mxu0 0.0
    %859 = vmatpush1.msra.mxu0 0.0
    %860 = vmatprep.subr.mxu0 0.0
    %861 = vmatpush1.msra.mxu0 0.0
    %862 = vmatprep.subr.mxu0 0.0
    %863 = vmatpush1.msra.mxu0 0.0
    %864 = vmatprep.subr.mxu0 0.0
    %865 = vmatpush1.msra.mxu0 0.0
    %866 = vmatprep.subr.mxu0 0.0
    %867 = vmatpush1.msra.mxu0 0.0
    %868 = vmatprep.subr.mxu0 0.0
    %869 = vmatpush1.msra.mxu0 0.0
    %870 = vmatprep.mubr.f32.mxu0 0.0
    %871 = vmatmul.mubr.f32.gmra.mrb[0].mxu0 %v664
    %v872 = vpop.f32.mrb[0].mxu0
    %v873 = vadd.f32 %v731, %v872
    %v874 = vpop.f32.mrb[0].mxu0
    %875 = vdwg.mxu0
    %s876 = scalar_lea.vmem [#allocation9], 384
    %v877 = vld [vmem:[%s876] sm:$0xff]
    %v878 = vld [vmem:[%s876 + $0x8] sm:$0xff]
    %v879 = vld [vmem:[%s876 + $0x10] sm:$0xff]
    %v880 = vld [vmem:[%s876 + $0x18] sm:$0xff]
    %v881 = vld [vmem:[%s876 + $0x20] sm:$0xff]
    %v882 = vld [vmem:[%s876 + $0x28] sm:$0xff]
    %v883 = vld [vmem:[%s876 + $0x30] sm:$0xff]
    %v884 = vld [vmem:[%s876 + $0x38] sm:$0xff]
    %v885 = vld [vmem:[%s876 + $0x40] sm:$0xff]
    %v886 = vld [vmem:[%s876 + $0x48] sm:$0xff]
    %v887 = vld [vmem:[%s876 + $0x50] sm:$0xff]
    %v888 = vld [vmem:[%s876 + $0x58] sm:$0xff]
    %v889 = vld [vmem:[%s876 + $0x60] sm:$0xff]
    %v890 = vld [vmem:[%s876 + $0x68] sm:$0xff]
    %v891 = vld [vmem:[%s876 + $0x70] sm:$0xff]
    %v892 = vld [vmem:[%s876 + $0x78] sm:$0xff]
    %v893 = vld [vmem:[%s876 + $0x80] sm:$0xff]
    %v894 = vld [vmem:[%s876 + $0x88] sm:$0xff]
    %v895 = vld [vmem:[%s876 + $0x90] sm:$0xff]
    %v896 = vld [vmem:[%s876 + $0x98] sm:$0xff]
    %v897 = vld [vmem:[%s876 + $0xa0] sm:$0xff]
    %v898 = vld [vmem:[%s876 + $0xa8] sm:$0xff]
    %v899 = vld [vmem:[%s876 + $0xb0] sm:$0xff]
    %v900 = vld [vmem:[%s876 + $0xb8] sm:$0xff]
    %v901 = vld [vmem:[%s876 + $0xc0] sm:$0xff]
    %v902 = vld [vmem:[%s876 + $0xc8] sm:$0xff]
    %v903 = vld [vmem:[%s876 + $0xd0] sm:$0xff]
    %v904 = vld [vmem:[%s876 + $0xd8] sm:$0xff]
    %v905 = vld [vmem:[%s876 + $0xe0] sm:$0xff]
    %v906 = vld [vmem:[%s876 + $0xe8] sm:$0xff]
    %v907 = vld [vmem:[%s876 + $0xf0] sm:$0xff]
    %v908 = vld [vmem:[%s876 + $0xf8] sm:$0xff]
    %v909 = vld [vmem:[%s876 + $0x100] sm:$0xff]
    %v910 = vld [vmem:[%s876 + $0x108] sm:$0xff]
    %v911 = vld [vmem:[%s876 + $0x110] sm:$0xff]
    %v912 = vld [vmem:[%s876 + $0x118] sm:$0xff]
    %v913 = vld [vmem:[%s876 + $0x120] sm:$0xff]
    %v914 = vld [vmem:[%s876 + $0x128] sm:$0xff]
    %v915 = vld [vmem:[%s876 + $0x130] sm:$0xff]
    %v916 = vld [vmem:[%s876 + $0x138] sm:$0xff]
    %v917 = vld [vmem:[%s876 + $0x140] sm:$0xff]
    %v918 = vld [vmem:[%s876 + $0x148] sm:$0xff]
    %v919 = vld [vmem:[%s876 + $0x150] sm:$0xff]
    %v920 = vld [vmem:[%s876 + $0x158] sm:$0xff]
    %v921 = vld [vmem:[%s876 + $0x160] sm:$0xff]
    %v922 = vld [vmem:[%s876 + $0x168] sm:$0xff]
    %v923 = vld [vmem:[%s876 + $0x170] sm:$0xff]
    %v924 = vld [vmem:[%s876 + $0x178] sm:$0xff]
    %s925 = scalar_lea.vmem %s5, 3
    %v926 = vld [vmem:[%s925] sm:$0x7]
    %v928 = vlaneseq
    %v929 = vshrl.u32 %v928, 7
    %v930 = vsub.s32 0, %v929
    %v931 = vrot.slane %v926, %v930
    %v932 = vlaneseq
    %v933 = vshrl.u32 %v932, 7
    %v934 = vsub.s32 1, %v933
    %v935 = vrot.slane %v926, %v934
    %v936 = vlaneseq
    %v937 = vshrl.u32 %v936, 7
    %v938 = vsub.s32 2, %v937
    %v939 = vrot.slane %v926, %v938
    %943 = vmatprep.subr.mxu0 %v878
    %944 = vmatpush1.msra.mxu0 %v877
    %945 = vmatprep.subr.mxu0 %v881
    %946 = vmatpush1.msra.mxu0 %v880
    %947 = vmatprep.subr.mxu0 %v884
    %948 = vmatpush1.msra.mxu0 %v883
    %949 = vmatprep.subr.mxu0 %v887
    %950 = vmatpush1.msra.mxu0 %v886
    %951 = vmatprep.subr.mxu0 %v890
    %952 = vmatpush1.msra.mxu0 %v889
    %953 = vmatprep.subr.mxu0 %v893
    %954 = vmatpush1.msra.mxu0 %v892
    %955 = vmatprep.subr.mxu0 %v896
    %956 = vmatpush1.msra.mxu0 %v895
    %957 = vmatprep.subr.mxu0 %v899
    %958 = vmatpush1.msra.mxu0 %v898
    %959 = vmatprep.subr.mxu0 %v902
    %960 = vmatpush1.msra.mxu0 %v901
    %961 = vmatprep.subr.mxu0 %v905
    %962 = vmatpush1.msra.mxu0 %v904
    %963 = vmatprep.subr.mxu0 %v908
    %964 = vmatpush1.msra.mxu0 %v907
    %965 = vmatprep.subr.mxu0 %v911
    %966 = vmatpush1.msra.mxu0 %v910
    %967 = vmatprep.subr.mxu0 %v914
    %968 = vmatpush1.msra.mxu0 %v913
    %969 = vmatprep.subr.mxu0 %v917
    %970 = vmatpush1.msra.mxu0 %v916
    %971 = vmatprep.subr.mxu0 %v920
    %972 = vmatpush1.msra.mxu0 %v919
    %973 = vmatprep.subr.mxu0 %v923
    %974 = vmatpush1.msra.mxu0 %v922
    %975 = vmatprep.subr.mxu0 0.0
    %976 = vmatpush1.msra.mxu0 0.0
    %977 = vmatprep.subr.mxu0 0.0
    %978 = vmatpush1.msra.mxu0 0.0
    %979 = vmatprep.subr.mxu0 0.0
    %980 = vmatpush1.msra.mxu0 0.0
    %981 = vmatprep.subr.mxu0 0.0
    %982 = vmatpush1.msra.mxu0 0.0
    %983 = vmatprep.subr.mxu0 0.0
    %984 = vmatpush1.msra.mxu0 0.0
    %985 = vmatprep.subr.mxu0 0.0
    %986 = vmatpush1.msra.mxu0 0.0
    %987 = vmatprep.subr.mxu0 0.0
    %988 = vmatpush1.msra.mxu0 0.0
    %989 = vmatprep.subr.mxu0 0.0
    %990 = vmatpush1.msra.mxu0 0.0
    %991 = vmatprep.subr.mxu0 0.0
    %992 = vmatpush1.msra.mxu0 0.0
    %993 = vmatprep.subr.mxu0 0.0
    %994 = vmatpush1.msra.mxu0 0.0
    %995 = vmatprep.subr.mxu0 0.0
    %996 = vmatpush1.msra.mxu0 0.0
    %997 = vmatprep.subr.mxu0 0.0
    %998 = vmatpush1.msra.mxu0 0.0
    %999 = vmatprep.subr.mxu0 0.0
    %1000 = vmatpush1.msra.mxu0 0.0
    %1001 = vmatprep.subr.mxu0 0.0
    %1002 = vmatpush1.msra.mxu0 0.0
    %1003 = vmatprep.subr.mxu0 0.0
    %1004 = vmatpush1.msra.mxu0 0.0
    %1005 = vmatprep.subr.mxu0 0.0
    %1006 = vmatpush1.msra.mxu0 0.0
    %1007 = vmatprep.mubr.f32.mxu0 0.0
    %1008 = vmatmul.mubr.f32.gmra.mrb[0].mxu0 %v667
    %v1009 = vpop.f32.mrb[0].mxu0
    %v1010 = vadd.f32 %v931, %v1009
    %v1011 = vpop.f32.mrb[0].mxu0
    %v1012 = vadd.f32 %v935, %v1011
    %1013 = vdwg.mxu0
    %1014 = vmatprep.subr.mxu0 0.0
    %1015 = vmatpush1.msra.mxu0 %v879
    %1016 = vmatprep.subr.mxu0 0.0
    %1017 = vmatpush1.msra.mxu0 %v882
    %1018 = vmatprep.subr.mxu0 0.0
    %1019 = vmatpush1.msra.mxu0 %v885
    %1020 = vmatprep.subr.mxu0 0.0
    %1021 = vmatpush1.msra.mxu0 %v888
    %1022 = vmatprep.subr.mxu0 0.0
    %1023 = vmatpush1.msra.mxu0 %v891
    %1024 = vmatprep.subr.mxu0 0.0
    %1025 = vmatpush1.msra.mxu0 %v894
    %1026 = vmatprep.subr.mxu0 0.0
    %1027 = vmatpush1.msra.mxu0 %v897
    %1028 = vmatprep.subr.mxu0 0.0
    %1029 = vmatpush1.msra.mxu0 %v900
    %1030 = vmatprep.subr.mxu0 0.0
    %1031 = vmatpush1.msra.mxu0 %v903
    %1032 = vmatprep.subr.mxu0 0.0
    %1033 = vmatpush1.msra.mxu0 %v906
    %1034 = vmatprep.subr.mxu0 0.0
    %1035 = vmatpush1.msra.mxu0 %v909
    %1036 = vmatprep.subr.mxu0 0.0
    %1037 = vmatpush1.msra.mxu0 %v912
    %1038 = vmatprep.subr.mxu0 0.0
    %1039 = vmatpush1.msra.mxu0 %v915
    %1040 = vmatprep.subr.mxu0 0.0
    %1041 = vmatpush1.msra.mxu0 %v918
    %1042 = vmatprep.subr.mxu0 0.0
    %1043 = vmatpush1.msra.mxu0 %v921
    %1044 = vmatprep.subr.mxu0 0.0
    %1045 = vmatpush1.msra.mxu0 %v924
    %1046 = vmatprep.subr.mxu0 0.0
    %1047 = vmatpush1.msra.mxu0 0.0
    %1048 = vmatprep.subr.mxu0 0.0
    %1049 = vmatpush1.msra.mxu0 0.0
    %1050 = vmatprep.subr.mxu0 0.0
    %1051 = vmatpush1.msra.mxu0 0.0
    %1052 = vmatprep.subr.mxu0 0.0
    %1053 = vmatpush1.msra.mxu0 0.0
    %1054 = vmatprep.subr.mxu0 0.0
    %1055 = vmatpush1.msra.mxu0 0.0
    %1056 = vmatprep.subr.mxu0 0.0
    %1057 = vmatpush1.msra.mxu0 0.0
    %1058 = vmatprep.subr.mxu0 0.0
    %1059 = vmatpush1.msra.mxu0 0.0
    %1060 = vmatprep.subr.mxu0 0.0
    %1061 = vmatpush1.msra.mxu0 0.0
    %1062 = vmatprep.subr.mxu0 0.0
    %1063 = vmatpush1.msra.mxu0 0.0
    %1064 = vmatprep.subr.mxu0 0.0
    %1065 = vmatpush1.msra.mxu0 0.0
    %1066 = vmatprep.subr.mxu0 0.0
    %1067 = vmatpush1.msra.mxu0 0.0
    %1068 = vmatprep.subr.mxu0 0.0
    %1069 = vmatpush1.msra.mxu0 0.0
    %1070 = vmatprep.subr.mxu0 0.0
    %1071 = vmatpush1.msra.mxu0 0.0
    %1072 = vmatprep.subr.mxu0 0.0
    %1073 = vmatpush1.msra.mxu0 0.0
    %1074 = vmatprep.subr.mxu0 0.0
    %1075 = vmatpush1.msra.mxu0 0.0
    %1076 = vmatprep.subr.mxu0 0.0
    %1077 = vmatpush1.msra.mxu0 0.0
    %1078 = vmatprep.mubr.f32.mxu0 0.0
    %1079 = vmatmul.mubr.f32.gmra.mrb[0].mxu0 %v667
    %v1080 = vpop.f32.mrb[0].mxu0
    %v1081 = vadd.f32 %v939, %v1080
    %v1082 = vpop.f32.mrb[0].mxu0
    %1083 = vdwg.mxu0
    %v1084 = vadd.f32 %v802, %v1010
    %v1085 = vxor.u32 %v1084, 2147483648
    %v1086 = vmul.f32 %v1085, 1.442695
    %v1087 = vpow.pop %v1086
    %v1088 = vadd.f32 %v1087, 1.0
    %v1089 = vrcp.pop %v1088
    %v1090 = vmul.f32 1.0, %v1089
    %v1091 = vadd.f32 %v804, %v1012
    %v1092 = vxor.u32 %v1091, 2147483648
    %v1093 = vmul.f32 %v1092, 1.442695
    %v1094 = vpow.pop %v1093
    %v1095 = vadd.f32 %v1094, 1.0
    %v1096 = vrcp.pop %v1095
    %v1097 = vmul.f32 1.0, %v1096
    %v1098 = vmul.f32 %v1090, %v1081
    %v1099 = vadd.f32 %v873, %v1098
    %v1100 = vtanh.pop %v1099
    %v1101 = vsub.f32 1.0, %v1097
    %v1102 = vmul.f32 %v1101, %v1100
    %v1103 = vmul.f32 %v1097, %v667
    %v1104 = vadd.f32 %v1102, %v1103
    %s1105 = scalar_lea.vmem %s9, 8
    %1106 = vst [vmem:[%s1105] sm:$0xff] %v1104
    %v1107 = vld [vmem:[#allocation11] sm:$0xff]
    %v1108 = vld [vmem:[#allocation11 + $0x8] sm:$0xff]
    %v1109 = vld [vmem:[#allocation11 + $0x10] sm:$0xff]
    %v1110 = vld [vmem:[#allocation11 + $0x18] sm:$0xff]
    %v1111 = vld [vmem:[#allocation11 + $0x20] sm:$0xff]
    %v1112 = vld [vmem:[#allocation11 + $0x28] sm:$0xff]
    %v1113 = vld [vmem:[#allocation11 + $0x30] sm:$0xff]
    %v1114 = vld [vmem:[#allocation11 + $0x38] sm:$0xff]
    %v1115 = vld [vmem:[#allocation11 + $0x40] sm:$0xff]
    %v1116 = vld [vmem:[#allocation11 + $0x48] sm:$0xff]
    %v1117 = vld [vmem:[#allocation11 + $0x50] sm:$0xff]
    %v1118 = vld [vmem:[#allocation11 + $0x58] sm:$0xff]
    %v1119 = vld [vmem:[#allocation11 + $0x60] sm:$0xff]
    %v1120 = vld [vmem:[#allocation11 + $0x68] sm:$0xff]
    %v1121 = vld [vmem:[#allocation11 + $0x70] sm:$0xff]
    %v1122 = vld [vmem:[#allocation11 + $0x78] sm:$0xff]
    %v1123 = vld [vmem:[#allocation11 + $0x80] sm:$0xff]
    %v1124 = vld [vmem:[#allocation11 + $0x88] sm:$0xff]
    %v1125 = vld [vmem:[#allocation11 + $0x90] sm:$0xff]
    %v1126 = vld [vmem:[#allocation11 + $0x98] sm:$0xff]
    %v1127 = vld [vmem:[#allocation11 + $0xa0] sm:$0xff]
    %v1128 = vld [vmem:[#allocation11 + $0xa8] sm:$0xff]
    %v1129 = vld [vmem:[#allocation11 + $0xb0] sm:$0xff]
    %v1130 = vld [vmem:[#allocation11 + $0xb8] sm:$0xff]
    %v1131 = vld [vmem:[#allocation11 + $0xc0] sm:$0xff]
    %v1132 = vld [vmem:[#allocation11 + $0xc8] sm:$0xff]
    %v1133 = vld [vmem:[#allocation11 + $0xd0] sm:$0xff]
    %v1134 = vld [vmem:[#allocation11 + $0xd8] sm:$0xff]
    %v1135 = vld [vmem:[#allocation11 + $0xe0] sm:$0xff]
    %v1136 = vld [vmem:[#allocation11 + $0xe8] sm:$0xff]
    %v1137 = vld [vmem:[#allocation11 + $0xf0] sm:$0xff]
    %v1138 = vld [vmem:[#allocation11 + $0xf8] sm:$0xff]
    %v1139 = vld [vmem:[%s7] sm:$0x3]
    %v1141 = vlaneseq
    %v1142 = vshrl.u32 %v1141, 7
    %v1143 = vsub.s32 0, %v1142
    %v1144 = vrot.slane %v1139, %v1143
    %v1145 = vlaneseq
    %v1146 = vshrl.u32 %v1145, 7
    %v1147 = vsub.s32 1, %v1146
    %v1148 = vrot.slane %v1139, %v1147
    %1151 = vmatprep.subr.mxu0 %v1108
    %1152 = vmatpush1.msra.mxu0 %v1107
    %1153 = vmatprep.subr.mxu0 %v1110
    %1154 = vmatpush1.msra.mxu0 %v1109
    %1155 = vmatprep.subr.mxu0 %v1112
    %1156 = vmatpush1.msra.mxu0 %v1111
    %1157 = vmatprep.subr.mxu0 %v1114
    %1158 = vmatpush1.msra.mxu0 %v1113
    %1159 = vmatprep.subr.mxu0 %v1116
    %1160 = vmatpush1.msra.mxu0 %v1115
    %1161 = vmatprep.subr.mxu0 %v1118
    %1162 = vmatpush1.msra.mxu0 %v1117
    %1163 = vmatprep.subr.mxu0 %v1120
    %1164 = vmatpush1.msra.mxu0 %v1119
    %1165 = vmatprep.subr.mxu0 %v1122
    %1166 = vmatpush1.msra.mxu0 %v1121
    %1167 = vmatprep.subr.mxu0 %v1124
    %1168 = vmatpush1.msra.mxu0 %v1123
    %1169 = vmatprep.subr.mxu0 %v1126
    %1170 = vmatpush1.msra.mxu0 %v1125
    %1171 = vmatprep.subr.mxu0 %v1128
    %1172 = vmatpush1.msra.mxu0 %v1127
    %1173 = vmatprep.subr.mxu0 %v1130
    %1174 = vmatpush1.msra.mxu0 %v1129
    %1175 = vmatprep.subr.mxu0 %v1132
    %1176 = vmatpush1.msra.mxu0 %v1131
    %1177 = vmatprep.subr.mxu0 %v1134
    %1178 = vmatpush1.msra.mxu0 %v1133
    %1179 = vmatprep.subr.mxu0 %v1136
    %1180 = vmatpush1.msra.mxu0 %v1135
    %1181 = vmatprep.subr.mxu0 %v1138
    %1182 = vmatpush1.msra.mxu0 %v1137
    %1183 = vmatprep.subr.mxu0 0.0
    %1184 = vmatpush1.msra.mxu0 0.0
    %1185 = vmatprep.subr.mxu0 0.0
    %1186 = vmatpush1.msra.mxu0 0.0
    %1187 = vmatprep.subr.mxu0 0.0
    %1188 = vmatpush1.msra.mxu0 0.0
    %1189 = vmatprep.subr.mxu0 0.0
    %1190 = vmatpush1.msra.mxu0 0.0
    %1191 = vmatprep.subr.mxu0 0.0
    %1192 = vmatpush1.msra.mxu0 0.0
    %1193 = vmatprep.subr.mxu0 0.0
    %1194 = vmatpush1.msra.mxu0 0.0
    %1195 = vmatprep.subr.mxu0 0.0
    %1196 = vmatpush1.msra.mxu0 0.0
    %1197 = vmatprep.subr.mxu0 0.0
    %1198 = vmatpush1.msra.mxu0 0.0
    %1199 = vmatprep.subr.mxu0 0.0
    %1200 = vmatpush1.msra.mxu0 0.0
    %1201 = vmatprep.subr.mxu0 0.0
    %1202 = vmatpush1.msra.mxu0 0.0
    %1203 = vmatprep.subr.mxu0 0.0
    %1204 = vmatpush1.msra.mxu0 0.0
    %1205 = vmatprep.subr.mxu0 0.0
    %1206 = vmatpush1.msra.mxu0 0.0
    %1207 = vmatprep.subr.mxu0 0.0
    %1208 = vmatpush1.msra.mxu0 0.0
    %1209 = vmatprep.subr.mxu0 0.0
    %1210 = vmatpush1.msra.mxu0 0.0
    %1211 = vmatprep.subr.mxu0 0.0
    %1212 = vmatpush1.msra.mxu0 0.0
    %1213 = vmatprep.subr.mxu0 0.0
    %1214 = vmatpush1.msra.mxu0 0.0
    %1215 = vmatprep.mubr.f32.mxu0 0.0
    %1216 = vmatmul.mubr.f32.gmra.mrb[0].mxu0 %v1104
    %v1217 = vpop.f32.mrb[0].mxu0
    %v1218 = vadd.f32 %v1144, %v1217
    %v1219 = vpop.f32.mrb[0].mxu0
    %v1220 = vadd.f32 %v1148, %v1219
    %1221 = vdwg.mxu0
    %1222 = vst [vmem:[#allocation12] sm:$0xff] %v1218
    %1223 = vst [vmem:[#allocation12 + $0x8] sm:$0xff] %v1220
    // Predicated region
    $region82: #{simple_decoder_forward.1} parent=1 // pred_check
      _
    $region83: #{simple_decoder_forward.1} parent=1 // pred_check_branch
      %1225 = sbr.rel (0) target = $region85
    $region84: #{simple_decoder_forward.1} parent=1 // pred_region
      _
    $region85: #{simple_decoder_forward.1} parent=1 // pred_fallthru
      _
    // Predicated region
    $region86: #{simple_decoder_forward.1} parent=1 // pred_check
      _
    $region87: #{simple_decoder_forward.1} parent=1 // pred_check_branch
      %1227 = sbr.rel (0) target = $region89
    $region88: #{simple_decoder_forward.1} parent=1 // pred_region
      %s1229 = ssub.s32 256, 256
      %1230 = vsyncadd [#allocation6], %s1229
      %s1232 = sshll.u32 [#allocation12], 4
      %s1233 = int_to_ptr.vmem [resolvable:$true] %s1232
      %1235 = dma.vmem_to_hbm [thread:$0]  %s1233, 256, %s10, [#allocation6]
    $region89: #{simple_decoder_forward.1} parent=1 // pred_fallthru
      _
    // Predicated region
    $region90: #{simple_decoder_forward.1} parent=1 // pred_check
      _
    $region91: #{simple_decoder_forward.1} parent=1 // pred_check_branch
      %1237 = sbr.rel (0) target = $region93
    $region92: #{simple_decoder_forward.1} parent=1 // pred_region
      _
    $region93: #{simple_decoder_forward.1} parent=1 // pred_fallthru
      _
    // Predicated region
    $region94: #{simple_decoder_forward.1} parent=1 // pred_check
      _
    $region95: #{simple_decoder_forward.1} parent=1 // pred_check_branch
      %1239 = sbr.rel (0) target = $region97
    $region96: #{simple_decoder_forward.1} parent=1 // pred_region
      %1240 = dma.done [#allocation6], 256
    $region97: #{simple_decoder_forward.1} parent=1 // pred_fallthru
      _
    %1241 = vsyncpa [#allocation5], 1
    %1242 = vsyncpa [#allocation10], 1
    %1243 = vsyncpa [#allocation6], 1
    %1244 = vsyncpa [#allocation7], 1
  %1245 = vsyncmov [#allocation3]
  %s1246 = vpop.sfrf %1245
  %p1247 = scmp.eq.s32.totalorder %s1246, 0
  %p1248 = pneg %p1247
  %1250 = shalt.err (%p1248)
  %s1251 = scalar_lea.sflag [#allocation3], 1
  %1252 = vsyncmov %s1251
  %s1253 = vpop.sfrf %1252
  %p1254 = scmp.eq.s32.totalorder %s1253, 0
  %p1255 = pneg %p1254
  %1257 = shalt.err (%p1255)
  %s1258 = scalar_lea.sflag [#allocation3], 2
  %1259 = vsyncmov %s1258
  %s1260 = vpop.sfrf %1259
  %p1261 = scmp.eq.s32.totalorder %s1260, 0
  %p1262 = pneg %p1261
  %1264 = shalt.err (%p1262)
  %s1265 = scalar_lea.sflag [#allocation3], 3
  %1266 = vsyncmov %s1265
  %s1267 = vpop.sfrf %1266
  %p1268 = scmp.eq.s32.totalorder %s1267, 0
  %p1269 = pneg %p1268
  %1271 = shalt.err (%p1269)
  %s1272 = scalar_lea.sflag [#allocation3], 4
  %1273 = vsyncmov %s1272
  %s1274 = vpop.sfrf %1273
  %p1275 = scmp.eq.s32.totalorder %s1274, 0
  %p1276 = pneg %p1275
  %1278 = shalt.err (%p1276)
  %s1279 = scalar_lea.sflag [#allocation3], 5
  %1280 = vsyncmov %s1279
  %s1281 = vpop.sfrf %1280
  %p1282 = scmp.eq.s32.totalorder %s1281, 0
  %p1283 = pneg %p1282
  %1285 = shalt.err (%p1283)
  %s1286 = scalar_lea.sflag [#allocation3], 6
  %1287 = vsyncmov %s1286
  %s1288 = vpop.sfrf %1287
  %p1289 = scmp.eq.s32.totalorder %s1288, 0
  %p1290 = pneg %p1289
  %1292 = shalt.err (%p1290)
  %s1293 = scalar_lea.sflag [#allocation3], 7
  %1294 = vsyncmov %s1293
  %s1295 = vpop.sfrf %1294
  %p1296 = scmp.eq.s32.totalorder %s1295, 0
  %p1297 = pneg %p1296
  %1299 = shalt.err (%p1297)

</llo_original>
